<compile_context>
chip_gen: v6e
topology: v6e:2x2x1
jax: 0.10.0
libtpu: 0.0.40
codegen_flags: <defaults>
</compile_context>

<pallas_src>
import jax
import jax.numpy as jnp
from jax.experimental import pallas as pl
from jax.experimental.pallas import tpu as pltpu


# ----------------------------- config ---------------------------------------
class Config:
    n_views = 4
    view_dim = 16
    sent_hidden_dim = 32      # per-view sentence-representation dim
    hidden_dim = 32           # encoder hidden dim (H of hidden_state)
    pre_classifier_dim = 32
    num_classes = 3


# ----------------------------- fused kernel ----------------------------------
def mulnet_fused_kernel(hidden_ref, mask_ref, views_ref, watt_ref, wsent_ref,
                        bsent_ref, wpre_ref, bpre_ref, wcls_ref, bcls_ref,
                        logits_ref, att_ref, att_logit_ref):
    """Whole MulNetV2 forward in a single grid step (all views batched)."""
    B, S, H = hidden_ref.shape
    V = views_ref.shape[0]
    Ds = wsent_ref.shape[1]
    P = wpre_ref.shape[2]

    hidden = hidden_ref[...]                                    # (B, S, H) f32
    hidden_bf = hidden.astype(jnp.bfloat16)                     # MXU operand
    # Collapse leading dims (S == 8 keeps this layout-preserving on f32 tiles),
    # then cast for the MXU.
    hidden2d_bf = hidden.reshape(B * S, H).astype(jnp.bfloat16)  # (B*S, H)

    # --- all per-view attention directions in ONE matmul: (V, H) ---
    u_all = jnp.dot(views_ref[...], watt_ref[...],
                    preferred_element_type=jnp.float32)

    # --- attention logits: ONE non-batched MXU matmul over all (b, s) rows ---
    # (B*S, H) . (V, H)^T -> (B*S, V)   [no broadcast of u_all, no batched dot]
    scores2d = jnp.einsum("nh,vh->nv", hidden2d_bf,
                          u_all.astype(jnp.bfloat16),
                          preferred_element_type=jnp.float32)
    scores = scores2d.reshape(B, S, V)            # layout-preserving split
    att_logits = jnp.swapaxes(scores, 1, 2)       # (B, V, S): S on lanes

    # mask: 1.0 = keep, 0.0 = drop (additive -1e9 on masked positions)
    # TODO(synk): logits are returned post-mask; flip to pre-mask if the
    # original MVBlock returns the raw scores.
    mask = mask_ref[...]                                        # (B, S)
    att_logits = att_logits + (mask[:, None, :] - 1.0) * 1e9

    # --- softmax over seq (lane axis); exact reciprocal so returned att rows
    #     sum to 1 (perf-review correctness note) ---
    m = jnp.max(att_logits, axis=-1, keepdims=True)
    p = jnp.exp(att_logits - m)
    att = p / jnp.sum(p, axis=-1, keepdims=True)                # (B, V, S) f32

    # Store once in the computed layout; wrapper does the (V, B, S) transpose.
    att_logit_ref[...] = att_logits.astype(att_logit_ref.dtype)
    att_ref[...] = att.astype(att_ref.dtype)

    # --- weighted sum of hidden states: batched NN einsum on the MXU ---
    repr_bvh = jnp.einsum("bvs,bsh->bvh",
                          att.astype(jnp.bfloat16), hidden_bf,
                          preferred_element_type=jnp.float32)   # (B, V, H) f32

    # --- per-view sentence projection + pre_classifier, with the view-concat
    #     folded into the W_pre contraction (no (B, V*Ds) slab, no slice+concat
    #     relayout; W_pre arrives pre-reshaped as (V, Ds, P)). ---
    wsent = wsent_ref[...]                                      # (H, Ds) f32
    bsent = bsent_ref[...]                                      # (1, Ds)
    pre_in = jnp.zeros((B, P), jnp.float32)
    for v in range(V):                                          # static unroll
        sent_v = jnp.tanh(
            jnp.dot(repr_bvh[:, v, :], wsent,
                    preferred_element_type=jnp.float32) + bsent)     # (B, Ds)
        pre_in = pre_in + jnp.dot(sent_v, wpre_ref[v],
                                  preferred_element_type=jnp.float32)
    pre = jnp.tanh(pre_in + bpre_ref[...])                      # (B, P)
    cls = (jnp.dot(pre, wcls_ref[...], preferred_element_type=jnp.float32)
           + bcls_ref[...])                                     # (B, C)
    logits_ref[...] = cls.astype(logits_ref.dtype)


# ----------------------------- wrapper ----------------------------------------
def mulnet_v2_forward(params, hidden_state, mask=None):
    """Pallas implementation of MulNetV2.forward.

    Returns (logits, [view.transpose(0,1)], all_att, all_att_logits).
    all_att / all_att_logits are stacked (n_views, B, S); indexing [v] gives the
    per-view (B, S) tensor the PyTorch list would contain.
    """
    cfg = Config
    B, S, H = hidden_state.shape
    V, Dv, Ds = cfg.n_views, cfg.view_dim, cfg.sent_hidden_dim
    P, C = cfg.pre_classifier_dim, cfg.num_classes

    if mask is None:
        mask = jnp.ones((B, S), dtype=jnp.float32)

    # Fold the per-view concat into the pre_classifier contraction.
    w_pre_r = params["W_pre"].reshape(V, Ds, P)

    # TODO(synk): at production B/S, tile hidden_state over batch with a real
    # BlockSpec grid axis marked "parallel" (shards across v7x's 2 TensorCores),
    # re-derive the block size against v7x's 64 MiB / v5e's 16 MiB scoped VMEM,
    # set vmem_limit_bytes explicitly, and pass hidden_state pre-cast to bf16 to
    # halve HBM traffic.  At these toy sizes grid=(1,) (single block) wins.
    logits, att_bvs, att_logits_bvs = pl.pallas_call(
        mulnet_fused_kernel,
        out_shape=(
            jax.ShapeDtypeStruct((B, C), jnp.float32),
            jax.ShapeDtypeStruct((B, V, S), jnp.float32),
            jax.ShapeDtypeStruct((B, V, S), jnp.float32),
        ),
        grid_spec=pltpu.PrefetchScalarGridSpec(
            num_scalar_prefetch=0,
            grid=(1,),
            in_specs=[
                pl.BlockSpec((B, S, H), lambda i: (0, 0, 0)),      # hidden_state
                pl.BlockSpec((B, S), lambda i: (0, 0)),            # mask
                pl.BlockSpec((V, Dv), lambda i: (0, 0)),           # views
                pl.BlockSpec((Dv, H), lambda i: (0, 0)),           # W_att
                pl.BlockSpec((H, Ds), lambda i: (0, 0)),           # W_sent
                pl.BlockSpec((1, Ds), lambda i: (0, 0)),           # b_sent
                pl.BlockSpec((V, Ds, P), lambda i: (0, 0, 0)),     # W_pre (V,Ds,P)
                pl.BlockSpec((1, P), lambda i: (0, 0)),            # b_pre
                pl.BlockSpec((P, C), lambda i: (0, 0)),            # W_cls
                pl.BlockSpec((1, C), lambda i: (0, 0)),            # b_cls
            ],
            out_specs=[
                pl.BlockSpec((B, C), lambda i: (0, 0)),
                pl.BlockSpec((B, V, S), lambda i: (0, 0, 0)),
                pl.BlockSpec((B, V, S), lambda i: (0, 0, 0)),
            ],
        ),
        compiler_params=pltpu.CompilerParams(
            dimension_semantics=("arbitrary",)),
    )(hidden_state, mask, params["views"], params["W_att"], params["W_sent"],
      params["b_sent"], w_pre_r, params["b_pre"], params["W_cls"],
      params["b_cls"])

    # per-view (B, S) list convention -> stacked (V, B, S); cheap XLA transpose
    all_att = jnp.transpose(att_bvs, (1, 0, 2))
    all_att_logits = jnp.transpose(att_logits_bvs, (1, 0, 2))

    # view = views.unsqueeze(1).repeat(1, B, 1); returned as view.transpose(0, 1)
    view_t = jnp.broadcast_to(params["views"][None, :, :], (B, V, Dv))

    return logits, [view_t], all_att, all_att_logits


# ----------------------------- pure-JAX reference -----------------------------
def mulnet_v2_reference(params, hidden_state, mask=None):
    cfg = Config
    B, S, H = hidden_state.shape
    if mask is None:
        mask = jnp.ones((B, S), dtype=jnp.float32)
    u_all = params["views"] @ params["W_att"]                    # (V, H)
    logits = jnp.einsum("vh,bsh->vbs", u_all, hidden_state)
    logits = logits + (mask[None] - 1.0) * 1e9
    att = jax.nn.softmax(logits, axis=-1)                        # (V, B, S)
    repr_ = jnp.einsum("vbs,bsh->vbh", att, hidden_state)        # (V, B, H)
    sent = jnp.tanh(repr_ @ params["W_sent"] + params["b_sent"][0])
    x = jnp.concatenate([sent[v] for v in range(cfg.n_views)], axis=-1)
    pre = jnp.tanh(x @ params["W_pre"] + params["b_pre"][0])
    out = pre @ params["W_cls"] + params["b_cls"][0]
    return out, att


# ----------------------------- init + main ------------------------------------
def init_params(key):
    cfg = Config
    ks = jax.random.split(key, 8)
    scale = 0.1
    return {
        # Parameter(torch.Tensor(n_views, view_dim).uniform_(-0.2, 0.2))
        "views": jax.random.uniform(ks[0], (cfg.n_views, cfg.view_dim),
                                    jnp.float32, -0.2, 0.2),
        # MVBlock weights (stored as (in, out) so the kernel does x @ W + b)
        "W_att": jax.random.normal(ks[1], (cfg.view_dim, cfg.hidden_dim), jnp.float32) * scale,
        "W_sent": jax.random.normal(ks[2], (cfg.hidden_dim, cfg.sent_hidden_dim), jnp.float32) * scale,
        "b_sent": jax.random.normal(ks[3], (1, cfg.sent_hidden_dim), jnp.float32) * scale,
        # pre_classifier / classifier
        "W_pre": jax.random.normal(ks[4], (cfg.sent_hidden_dim * cfg.n_views,
                                           cfg.pre_classifier_dim), jnp.float32) * scale,
        "b_pre": jax.random.normal(ks[5], (1, cfg.pre_classifier_dim), jnp.float32) * scale,
        "W_cls": jax.random.normal(ks[6], (cfg.pre_classifier_dim, cfg.num_classes), jnp.float32) * scale,
        "b_cls": jax.random.normal(ks[7], (1, cfg.num_classes), jnp.float32) * scale,
    }


if __name__ == "__main__":
    cfg = Config
    key = jax.random.PRNGKey(0)
    k_param, k_x = jax.random.split(key)

    params = init_params(k_param)
    B, S = 2, 8
    hidden_state = jax.random.normal(k_x, (B, S, cfg.hidden_dim), jnp.float32)

    fwd = jax.jit(mulnet_v2_forward)
    logits, views_out, all_att, all_att_logits = jax.block_until_ready(
        fwd(params, hidden_state))

    # sanity-check against a pure-JAX f32 reference (bf16 MXU inputs -> loose tol)
    ref_logits, ref_att = mulnet_v2_reference(params, hidden_state)
    assert logits.shape == (B, cfg.num_classes)
    assert views_out[0].shape == (B, cfg.n_views, cfg.view_dim)
    assert all_att.shape == (cfg.n_views, B, S)
    assert all_att_logits.shape == (cfg.n_views, B, S)
    assert jnp.allclose(logits, ref_logits, rtol=5e-2, atol=5e-3)
    assert jnp.allclose(all_att, ref_att, rtol=5e-2, atol=5e-3)

    print("KERNEL_OK")
</pallas_src>

<mosaic_0001>
module attributes {stable_mosaic.version = 11 : i64} {
  func.func @mulnet_fused_kernel(%arg0: i32, %arg1: memref<2x8x32xf32, #tpu.memory_space<vmem>>, %arg2: memref<2x8xf32, #tpu.memory_space<vmem>>, %arg3: memref<4x16xf32, #tpu.memory_space<vmem>>, %arg4: memref<16x32xf32, #tpu.memory_space<vmem>>, %arg5: memref<32x32xf32, #tpu.memory_space<vmem>>, %arg6: memref<1x32xf32, #tpu.memory_space<vmem>>, %arg7: memref<4x32x32xf32, #tpu.memory_space<vmem>>, %arg8: memref<1x32xf32, #tpu.memory_space<vmem>>, %arg9: memref<32x3xf32, #tpu.memory_space<vmem>>, %arg10: memref<1x3xf32, #tpu.memory_space<vmem>>, %arg11: memref<2x3xf32, #tpu.memory_space<vmem>>, %arg12: memref<2x4x8xf32, #tpu.memory_space<vmem>>, %arg13: memref<2x4x8xf32, #tpu.memory_space<vmem>>) attributes {dimension_semantics = [#tpu.dimension_semantics<arbitrary>], iteration_bounds = array<i64: 1>, scalar_prefetch = 0 : i64, scratch_operands = 0 : i64, tpu.core_type = #tpu.core_type<tc>, window_params = [{pipeline_mode = #tpu.pipeline_mode<synchronous>, transform_indices = @transform_0, window_bounds = array<i64: 2, 8, 32>}, {pipeline_mode = #tpu.pipeline_mode<synchronous>, transform_indices = @transform_1, window_bounds = array<i64: 2, 8>}, {pipeline_mode = #tpu.pipeline_mode<synchronous>, transform_indices = @transform_2, window_bounds = array<i64: 4, 16>}, {pipeline_mode = #tpu.pipeline_mode<synchronous>, transform_indices = @transform_3, window_bounds = array<i64: 16, 32>}, {pipeline_mode = #tpu.pipeline_mode<synchronous>, transform_indices = @transform_4, window_bounds = array<i64: 32, 32>}, {pipeline_mode = #tpu.pipeline_mode<synchronous>, transform_indices = @transform_5, window_bounds = array<i64: 1, 32>}, {pipeline_mode = #tpu.pipeline_mode<synchronous>, transform_indices = @transform_6, window_bounds = array<i64: 4, 32, 32>}, {pipeline_mode = #tpu.pipeline_mode<synchronous>, transform_indices = @transform_7, window_bounds = array<i64: 1, 32>}, {pipeline_mode = #tpu.pipeline_mode<synchronous>, transform_indices = @transform_8, window_bounds = array<i64: 32, 3>}, {pipeline_mode = #tpu.pipeline_mode<synchronous>, transform_indices = @transform_9, window_bounds = array<i64: 1, 3>}, {pipeline_mode = #tpu.pipeline_mode<synchronous>, transform_indices = @transform_10, window_bounds = array<i64: 2, 3>}, {pipeline_mode = #tpu.pipeline_mode<synchronous>, transform_indices = @transform_11, window_bounds = array<i64: 2, 4, 8>}, {pipeline_mode = #tpu.pipeline_mode<synchronous>, transform_indices = @transform_12, window_bounds = array<i64: 2, 4, 8>}]} {
    %c0 = arith.constant 0 : index
    %c0_0 = arith.constant 0 : index
    %c0_1 = arith.constant 0 : index
    %0 = vector.load %arg1[%c0, %c0_0, %c0_1] : memref<2x8x32xf32, #tpu.memory_space<vmem>>, vector<2x8x32xf32>
    %1 = arith.truncf %0 : vector<2x8x32xf32> to vector<2x8x32xbf16>
    %2 = vector.shape_cast %0 : vector<2x8x32xf32> to vector<16x32xf32>
    %3 = arith.truncf %2 : vector<16x32xf32> to vector<16x32xbf16>
    %c0_2 = arith.constant 0 : index
    %c0_3 = arith.constant 0 : index
    %4 = vector.load %arg3[%c0_2, %c0_3] : memref<4x16xf32, #tpu.memory_space<vmem>>, vector<4x16xf32>
    %c0_4 = arith.constant 0 : index
    %c0_5 = arith.constant 0 : index
    %5 = vector.load %arg4[%c0_4, %c0_5] : memref<16x32xf32, #tpu.memory_space<vmem>>, vector<16x32xf32>
    %cst = arith.constant dense<0.000000e+00> : vector<4x32xf32>
    %6 = tpu.matmul %4, %5, %cst {dimension_numbers = #tpu.dot_dimension_numbers<[1], [0], [0], [1], [0, 0, 1, 1], [], []>} : vector<4x16xf32>, vector<16x32xf32>, vector<4x32xf32> -> vector<4x32xf32>
    %7 = arith.truncf %6 : vector<4x32xf32> to vector<4x32xbf16>
    "tpu.trace_start"() <{level = 10 : i32, message = "nh,vh->nv"}> : () -> ()
    %cst_6 = arith.constant dense<0.000000e+00> : vector<16x4xf32>
    %8 = tpu.matmul %3, %7, %cst_6 {dimension_numbers = #tpu.dot_dimension_numbers<[1], [1], [0], [0], [0, 0, 1, 0], [], []>} : vector<16x32xbf16>, vector<4x32xbf16>, vector<16x4xf32> -> vector<16x4xf32>
    "tpu.trace_stop"() : () -> ()
    %9 = vector.shape_cast %8 : vector<16x4xf32> to vector<2x8x4xf32>
    %10 = tpu.transpose %9, [0, 2, 1] : vector<2x8x4xf32> -> vector<2x4x8xf32>
    %c0_7 = arith.constant 0 : index
    %c0_8 = arith.constant 0 : index
    %11 = vector.load %arg2[%c0_7, %c0_8] : memref<2x8xf32, #tpu.memory_space<vmem>>, vector<2x8xf32>
    %12 = vector.shape_cast %11 : vector<2x8xf32> to vector<2x1x8xf32>
    %cst_9 = arith.constant 1.000000e+00 : f32
    %13 = vector.broadcast %cst_9 : f32 to vector<2x1x8xf32>
    %14 = arith.subf %12, %13 : vector<2x1x8xf32>
    %cst_10 = arith.constant 1.000000e+09 : f32
    %15 = vector.broadcast %cst_10 : f32 to vector<2x1x8xf32>
    %16 = arith.mulf %14, %15 : vector<2x1x8xf32>
    %17 = vector.broadcast %16 : vector<2x1x8xf32> to vector<2x4x8xf32>
    %18 = arith.addf %10, %17 : vector<2x4x8xf32>
    %cst_11 = arith.constant dense<0xFF800000> : vector<2x4xf32>
    %19 = vector.multi_reduction <maximumf>, %18, %cst_11 [2] : vector<2x4x8xf32> to vector<2x4xf32>
    %20 = vector.shape_cast %19 : vector<2x4xf32> to vector<2x4x1xf32>
    %21 = vector.broadcast %20 : vector<2x4x1xf32> to vector<2x4x8xf32>
    %22 = arith.subf %18, %21 : vector<2x4x8xf32>
    %23 = math.exp %22 : vector<2x4x8xf32>
    %cst_12 = arith.constant dense<0.000000e+00> : vector<2x4xf32>
    %24 = vector.multi_reduction <add>, %23, %cst_12 [2] : vector<2x4x8xf32> to vector<2x4xf32>
    %25 = vector.shape_cast %24 : vector<2x4xf32> to vector<2x4x1xf32>
    %26 = vector.broadcast %25 : vector<2x4x1xf32> to vector<2x4x8xf32>
    %27 = arith.divf %23, %26 : vector<2x4x8xf32>
    %c0_13 = arith.constant 0 : index
    %c0_14 = arith.constant 0 : index
    %c0_15 = arith.constant 0 : index
    %28 = vector.load %arg13[%c0_13, %c0_14, %c0_15] : memref<2x4x8xf32, #tpu.memory_space<vmem>>, vector<2x4x8xf32>
    tpu.vector_store %arg13[%c0_13, %c0_14, %c0_15], %18 {strides = array<i32>} : memref<2x4x8xf32, #tpu.memory_space<vmem>>, vector<2x4x8xf32>,
    %c0_16 = arith.constant 0 : index
    %c0_17 = arith.constant 0 : index
    %c0_18 = arith.constant 0 : index
    %29 = vector.load %arg12[%c0_16, %c0_17, %c0_18] : memref<2x4x8xf32, #tpu.memory_space<vmem>>, vector<2x4x8xf32>
    tpu.vector_store %arg12[%c0_16, %c0_17, %c0_18], %27 {strides = array<i32>} : memref<2x4x8xf32, #tpu.memory_space<vmem>>, vector<2x4x8xf32>,
    %30 = arith.truncf %27 : vector<2x4x8xf32> to vector<2x4x8xbf16>
    "tpu.trace_start"() <{level = 10 : i32, message = "bvs,bsh->bvh"}> : () -> ()
    %cst_19 = arith.constant dense<0.000000e+00> : vector<2x4x32xf32>
    %31 = tpu.matmul %30, %1, %cst_19 {dimension_numbers = #tpu.dot_dimension_numbers<[2], [1], [1], [2], [0, 0, 0, 1, 1, 2], [0], [0]>} : vector<2x4x8xbf16>, vector<2x8x32xbf16>, vector<2x4x32xf32> -> vector<2x4x32xf32>
    "tpu.trace_stop"() : () -> ()
    %c0_20 = arith.constant 0 : index
    %c0_21 = arith.constant 0 : index
    %32 = vector.load %arg5[%c0_20, %c0_21] : memref<32x32xf32, #tpu.memory_space<vmem>>, vector<32x32xf32>
    %c0_22 = arith.constant 0 : index
    %c0_23 = arith.constant 0 : index
    %33 = vector.load %arg6[%c0_22, %c0_23] : memref<1x32xf32, #tpu.memory_space<vmem>>, vector<1x32xf32>
    %cst_24 = arith.constant 0.000000e+00 : f32
    %34 = vector.broadcast %cst_24 : f32 to vector<2x32xf32>
    %35 = vector.extract_strided_slice %31 {offsets = [0, 0, 0], sizes = [2, 1, 32], strides = [1, 1, 1]} : vector<2x4x32xf32> to vector<2x1x32xf32>
    %36 = vector.shape_cast %35 : vector<2x1x32xf32> to vector<2x32xf32>
    %cst_25 = arith.constant dense<0.000000e+00> : vector<2x32xf32>
    %37 = tpu.matmul %36, %32, %cst_25 {dimension_numbers = #tpu.dot_dimension_numbers<[1], [0], [0], [1], [0, 0, 1, 1], [], []>} : vector<2x32xf32>, vector<32x32xf32>, vector<2x32xf32> -> vector<2x32xf32>
    %38 = vector.broadcast %33 : vector<1x32xf32> to vector<2x32xf32>
    %39 = arith.addf %37, %38 : vector<2x32xf32>
    %40 = math.tanh %39 : vector<2x32xf32>
    %c0_26 = arith.constant 0 : index
    %c0_27 = arith.constant 0 : index
    %c0_28 = arith.constant 0 : index
    %41 = vector.load %arg7[%c0_26, %c0_27, %c0_28] : memref<4x32x32xf32, #tpu.memory_space<vmem>>, vector<1x32x32xf32>
    %42 = vector.shape_cast %41 : vector<1x32x32xf32> to vector<32x32xf32>
    %cst_29 = arith.constant dense<0.000000e+00> : vector<2x32xf32>
    %43 = tpu.matmul %40, %42, %cst_29 {dimension_numbers = #tpu.dot_dimension_numbers<[1], [0], [0], [1], [0, 0, 1, 1], [], []>} : vector<2x32xf32>, vector<32x32xf32>, vector<2x32xf32> -> vector<2x32xf32>
    %44 = arith.addf %34, %43 : vector<2x32xf32>
    %45 = vector.extract_strided_slice %31 {offsets = [0, 1, 0], sizes = [2, 1, 32], strides = [1, 1, 1]} : vector<2x4x32xf32> to vector<2x1x32xf32>
    %46 = vector.shape_cast %45 : vector<2x1x32xf32> to vector<2x32xf32>
    %cst_30 = arith.constant dense<0.000000e+00> : vector<2x32xf32>
    %47 = tpu.matmul %46, %32, %cst_30 {dimension_numbers = #tpu.dot_dimension_numbers<[1], [0], [0], [1], [0, 0, 1, 1], [], []>} : vector<2x32xf32>, vector<32x32xf32>, vector<2x32xf32> -> vector<2x32xf32>
    %48 = vector.broadcast %33 : vector<1x32xf32> to vector<2x32xf32>
    %49 = arith.addf %47, %48 : vector<2x32xf32>
    %50 = math.tanh %49 : vector<2x32xf32>
    %c1 = arith.constant 1 : index
    %c0_31 = arith.constant 0 : index
    %c0_32 = arith.constant 0 : index
    %51 = vector.load %arg7[%c1, %c0_31, %c0_32] : memref<4x32x32xf32, #tpu.memory_space<vmem>>, vector<1x32x32xf32>
    %52 = vector.shape_cast %51 : vector<1x32x32xf32> to vector<32x32xf32>
    %cst_33 = arith.constant dense<0.000000e+00> : vector<2x32xf32>
    %53 = tpu.matmul %50, %52, %cst_33 {dimension_numbers = #tpu.dot_dimension_numbers<[1], [0], [0], [1], [0, 0, 1, 1], [], []>} : vector<2x32xf32>, vector<32x32xf32>, vector<2x32xf32> -> vector<2x32xf32>
    %54 = arith.addf %44, %53 : vector<2x32xf32>
    %55 = vector.extract_strided_slice %31 {offsets = [0, 2, 0], sizes = [2, 1, 32], strides = [1, 1, 1]} : vector<2x4x32xf32> to vector<2x1x32xf32>
    %56 = vector.shape_cast %55 : vector<2x1x32xf32> to vector<2x32xf32>
    %cst_34 = arith.constant dense<0.000000e+00> : vector<2x32xf32>
    %57 = tpu.matmul %56, %32, %cst_34 {dimension_numbers = #tpu.dot_dimension_numbers<[1], [0], [0], [1], [0, 0, 1, 1], [], []>} : vector<2x32xf32>, vector<32x32xf32>, vector<2x32xf32> -> vector<2x32xf32>
    %58 = vector.broadcast %33 : vector<1x32xf32> to vector<2x32xf32>
    %59 = arith.addf %57, %58 : vector<2x32xf32>
    %60 = math.tanh %59 : vector<2x32xf32>
    %c2 = arith.constant 2 : index
    %c0_35 = arith.constant 0 : index
    %c0_36 = arith.constant 0 : index
    %61 = vector.load %arg7[%c2, %c0_35, %c0_36] : memref<4x32x32xf32, #tpu.memory_space<vmem>>, vector<1x32x32xf32>
    %62 = vector.shape_cast %61 : vector<1x32x32xf32> to vector<32x32xf32>
    %cst_37 = arith.constant dense<0.000000e+00> : vector<2x32xf32>
    %63 = tpu.matmul %60, %62, %cst_37 {dimension_numbers = #tpu.dot_dimension_numbers<[1], [0], [0], [1], [0, 0, 1, 1], [], []>} : vector<2x32xf32>, vector<32x32xf32>, vector<2x32xf32> -> vector<2x32xf32>
    %64 = arith.addf %54, %63 : vector<2x32xf32>
    %65 = vector.extract_strided_slice %31 {offsets = [0, 3, 0], sizes = [2, 1, 32], strides = [1, 1, 1]} : vector<2x4x32xf32> to vector<2x1x32xf32>
    %66 = vector.shape_cast %65 : vector<2x1x32xf32> to vector<2x32xf32>
    %cst_38 = arith.constant dense<0.000000e+00> : vector<2x32xf32>
    %67 = tpu.matmul %66, %32, %cst_38 {dimension_numbers = #tpu.dot_dimension_numbers<[1], [0], [0], [1], [0, 0, 1, 1], [], []>} : vector<2x32xf32>, vector<32x32xf32>, vector<2x32xf32> -> vector<2x32xf32>
    %68 = vector.broadcast %33 : vector<1x32xf32> to vector<2x32xf32>
    %69 = arith.addf %67, %68 : vector<2x32xf32>
    %70 = math.tanh %69 : vector<2x32xf32>
    %c3 = arith.constant 3 : index
    %c0_39 = arith.constant 0 : index
    %c0_40 = arith.constant 0 : index
    %71 = vector.load %arg7[%c3, %c0_39, %c0_40] : memref<4x32x32xf32, #tpu.memory_space<vmem>>, vector<1x32x32xf32>
    %72 = vector.shape_cast %71 : vector<1x32x32xf32> to vector<32x32xf32>
    %cst_41 = arith.constant dense<0.000000e+00> : vector<2x32xf32>
    %73 = tpu.matmul %70, %72, %cst_41 {dimension_numbers = #tpu.dot_dimension_numbers<[1], [0], [0], [1], [0, 0, 1, 1], [], []>} : vector<2x32xf32>, vector<32x32xf32>, vector<2x32xf32> -> vector<2x32xf32>
    %74 = arith.addf %64, %73 : vector<2x32xf32>
    %c0_42 = arith.constant 0 : index
    %c0_43 = arith.constant 0 : index
    %75 = vector.load %arg8[%c0_42, %c0_43] : memref<1x32xf32, #tpu.memory_space<vmem>>, vector<1x32xf32>
    %76 = vector.broadcast %75 : vector<1x32xf32> to vector<2x32xf32>
    %77 = arith.addf %74, %76 : vector<2x32xf32>
    %78 = math.tanh %77 : vector<2x32xf32>
    %c0_44 = arith.constant 0 : index
    %c0_45 = arith.constant 0 : index
    %79 = vector.load %arg9[%c0_44, %c0_45] : memref<32x3xf32, #tpu.memory_space<vmem>>, vector<32x3xf32>
    %cst_46 = arith.constant dense<0.000000e+00> : vector<2x3xf32>
    %80 = tpu.matmul %78, %79, %cst_46 {dimension_numbers = #tpu.dot_dimension_numbers<[1], [0], [0], [1], [0, 0, 1, 1], [], []>} : vector<2x32xf32>, vector<32x3xf32>, vector<2x3xf32> -> vector<2x3xf32>
    %c0_47 = arith.constant 0 : index
    %c0_48 = arith.constant 0 : index
    %81 = vector.load %arg10[%c0_47, %c0_48] : memref<1x3xf32, #tpu.memory_space<vmem>>, vector<1x3xf32>
    %82 = vector.broadcast %81 : vector<1x3xf32> to vector<2x3xf32>
    %83 = arith.addf %80, %82 : vector<2x3xf32>
    %c0_49 = arith.constant 0 : index
    %c0_50 = arith.constant 0 : index
    %84 = vector.load %arg11[%c0_49, %c0_50] : memref<2x3xf32, #tpu.memory_space<vmem>>, vector<2x3xf32>
    tpu.vector_store %arg11[%c0_49, %c0_50], %83 {strides = array<i32>} : memref<2x3xf32, #tpu.memory_space<vmem>>, vector<2x3xf32>,
    return
  }
  func.func @transform_0(%arg0: i32) -> (i32, i32, i32) {
    %c0_i32 = arith.constant 0 : i32
    %c0_i32_0 = arith.constant 0 : i32
    %c0_i32_1 = arith.constant 0 : i32
    %c0_i32_2 = arith.constant 0 : i32
    return %c0_i32, %c0_i32_0, %c0_i32_1 : i32, i32, i32
  }
  func.func @transform_1(%arg0: i32) -> (i32, i32) {
    %c0_i32 = arith.constant 0 : i32
    %c0_i32_0 = arith.constant 0 : i32
    %c0_i32_1 = arith.constant 0 : i32
    return %c0_i32, %c0_i32_0 : i32, i32
  }
  func.func @transform_2(%arg0: i32) -> (i32, i32) {
    %c0_i32 = arith.constant 0 : i32
    %c0_i32_0 = arith.constant 0 : i32
    %c0_i32_1 = arith.constant 0 : i32
    return %c0_i32, %c0_i32_0 : i32, i32
  }
  func.func @transform_3(%arg0: i32) -> (i32, i32) {
    %c0_i32 = arith.constant 0 : i32
    %c0_i32_0 = arith.constant 0 : i32
    %c0_i32_1 = arith.constant 0 : i32
    return %c0_i32, %c0_i32_0 : i32, i32
  }
  func.func @transform_4(%arg0: i32) -> (i32, i32) {
    %c0_i32 = arith.constant 0 : i32
    %c0_i32_0 = arith.constant 0 : i32
    %c0_i32_1 = arith.constant 0 : i32
    return %c0_i32, %c0_i32_0 : i32, i32
  }
  func.func @transform_5(%arg0: i32) -> (i32, i32) {
    %c0_i32 = arith.constant 0 : i32
    %c0_i32_0 = arith.constant 0 : i32
    %c0_i32_1 = arith.constant 0 : i32
    return %c0_i32, %c0_i32_0 : i32, i32
  }
  func.func @transform_6(%arg0: i32) -> (i32, i32, i32) {
    %c0_i32 = arith.constant 0 : i32
    %c0_i32_0 = arith.constant 0 : i32
    %c0_i32_1 = arith.constant 0 : i32
    %c0_i32_2 = arith.constant 0 : i32
    return %c0_i32, %c0_i32_0, %c0_i32_1 : i32, i32, i32
  }
  func.func @transform_7(%arg0: i32) -> (i32, i32) {
    %c0_i32 = arith.constant 0 : i32
    %c0_i32_0 = arith.constant 0 : i32
    %c0_i32_1 = arith.constant 0 : i32
    return %c0_i32, %c0_i32_0 : i32, i32
  }
  func.func @transform_8(%arg0: i32) -> (i32, i32) {
    %c0_i32 = arith.constant 0 : i32
    %c0_i32_0 = arith.constant 0 : i32
    %c0_i32_1 = arith.constant 0 : i32
    return %c0_i32, %c0_i32_0 : i32, i32
  }
  func.func @transform_9(%arg0: i32) -> (i32, i32) {
    %c0_i32 = arith.constant 0 : i32
    %c0_i32_0 = arith.constant 0 : i32
    %c0_i32_1 = arith.constant 0 : i32
    return %c0_i32, %c0_i32_0 : i32, i32
  }
  func.func @transform_10(%arg0: i32) -> (i32, i32) {
    %c0_i32 = arith.constant 0 : i32
    %c0_i32_0 = arith.constant 0 : i32
    %c0_i32_1 = arith.constant 0 : i32
    return %c0_i32, %c0_i32_0 : i32, i32
  }
  func.func @transform_11(%arg0: i32) -> (i32, i32, i32) {
    %c0_i32 = arith.constant 0 : i32
    %c0_i32_0 = arith.constant 0 : i32
    %c0_i32_1 = arith.constant 0 : i32
    %c0_i32_2 = arith.constant 0 : i32
    return %c0_i32, %c0_i32_0, %c0_i32_1 : i32, i32, i32
  }
  func.func @transform_12(%arg0: i32) -> (i32, i32, i32) {
    %c0_i32 = arith.constant 0 : i32
    %c0_i32_0 = arith.constant 0 : i32
    %c0_i32_1 = arith.constant 0 : i32
    %c0_i32_2 = arith.constant 0 : i32
    return %c0_i32, %c0_i32_0, %c0_i32_1 : i32, i32, i32
  }
}

</mosaic_0001>

<llo_original>
// kernel: mulnet_v2_forward.1
$region0: #{mulnet_v2_forward.1}
  #allocation0 [shape = 'u32[]', space=smem, size = 0x4, offset = 0x4, fixed_abs, tag = 'smem constant byte address 0x4 - core index']
  #allocation1 [shape = 'u32[144,128]{1,0:T(1,128)}', space=vmem, size = 0x12000, scoped, tag = 'internal scratch']
  %s0 = inlined_call_operand.vmem [shape: f32[2,8,32], index: 0, kind: input, shape index: {}]
  %s1 = inlined_call_operand.vmem [shape: f32[2,8], index: 1, kind: input, shape index: {}]
  %s2 = inlined_call_operand.vmem [shape: f32[4,16], index: 2, kind: input, shape index: {}]
  %s3 = inlined_call_operand.vmem [shape: f32[16,32], index: 3, kind: input, shape index: {}]
  %s4 = inlined_call_operand.vmem [shape: f32[32,32], index: 4, kind: input, shape index: {}]
  %s5 = inlined_call_operand.vmem [shape: f32[1,32], index: 5, kind: input, shape index: {}]
  %s6 = inlined_call_operand.vmem [shape: f32[4,32,32], index: 6, kind: input, shape index: {}]
  %s7 = inlined_call_operand.vmem [shape: f32[1,32], index: 7, kind: input, shape index: {}]
  %s8 = inlined_call_operand.vmem [shape: f32[32,3], index: 8, kind: input, shape index: {}]
  %s9 = inlined_call_operand.vmem [shape: f32[1,3], index: 9, kind: input, shape index: {}]
  %s10 = inlined_call_operand.hbm [shape: f32[2,3], index: 10, kind: output, shape index: {0}]
  %s11 = inlined_call_operand.vmem [shape: f32[2,4,8], index: 11, kind: output, shape index: {1}]
  %s12 = inlined_call_operand.vmem [shape: f32[2,4,8], index: 12, kind: output, shape index: {2}]
  %13 = xla_tuple %s10, %s11, %s12
  %s14 = sld [smem:[#allocation0]]
  $region66: #{mulnet_v2_forward.1} parent=0
    _
  %s16 = ssub.s32 1, %s14
  %s17 = scalar_select 0, %s16, %s14
  $region1: #{mulnet_v2_forward.1} parent=0
    #allocation2 [shape = 'u8[1024]{0}', space=vmem, size = 0x400, scoped, tag = 'output window, operand 0, single buffered']
    #allocation3 [shape = 's32[1]{0}', space=sflag, size = 0x4, scoped, tag = 'scoped memory for mulnet_v2_forward.1']
    %18 = vsyncpa [#allocation3], 0
    // Predicated region
    $region2: #{mulnet_v2_forward.1} parent=1 // pred_check
      _
    $region3: #{mulnet_v2_forward.1} parent=1 // pred_check_branch
      %20 = sbr.rel (0) target = $region5
    $region4: #{mulnet_v2_forward.1} parent=1 // pred_region
      _
    $region5: #{mulnet_v2_forward.1} parent=1 // pred_fallthru
      _
    // Predicated region
    $region6: #{mulnet_v2_forward.1} parent=1 // pred_check
      _
    $region7: #{mulnet_v2_forward.1} parent=1 // pred_check_branch
      %22 = sbr.rel (0) target = $region9
    $region8: #{mulnet_v2_forward.1} parent=1 // pred_region
      _
    $region9: #{mulnet_v2_forward.1} parent=1 // pred_fallthru
      _
    // Predicated region
    $region10: #{mulnet_v2_forward.1} parent=1 // pred_check
      _
    $region11: #{mulnet_v2_forward.1} parent=1 // pred_check_branch
      %24 = sbr.rel (0) target = $region13
    $region12: #{mulnet_v2_forward.1} parent=1 // pred_region
      _
    $region13: #{mulnet_v2_forward.1} parent=1 // pred_fallthru
      _
    // Predicated region
    $region14: #{mulnet_v2_forward.1} parent=1 // pred_check
      _
    $region15: #{mulnet_v2_forward.1} parent=1 // pred_check_branch
      %26 = sbr.rel (0) target = $region17
    $region16: #{mulnet_v2_forward.1} parent=1 // pred_region
      _
    $region17: #{mulnet_v2_forward.1} parent=1 // pred_fallthru
      _
    // Predicated region
    $region18: #{mulnet_v2_forward.1} parent=1 // pred_check
      _
    $region19: #{mulnet_v2_forward.1} parent=1 // pred_check_branch
      %28 = sbr.rel (0) target = $region21
    $region20: #{mulnet_v2_forward.1} parent=1 // pred_region
      _
    $region21: #{mulnet_v2_forward.1} parent=1 // pred_fallthru
      _
    // Predicated region
    $region22: #{mulnet_v2_forward.1} parent=1 // pred_check
      _
    $region23: #{mulnet_v2_forward.1} parent=1 // pred_check_branch
      %30 = sbr.rel (0) target = $region25
    $region24: #{mulnet_v2_forward.1} parent=1 // pred_region
      _
    $region25: #{mulnet_v2_forward.1} parent=1 // pred_fallthru
      _
    // Predicated region
    $region26: #{mulnet_v2_forward.1} parent=1 // pred_check
      _
    $region27: #{mulnet_v2_forward.1} parent=1 // pred_check_branch
      %32 = sbr.rel (0) target = $region29
    $region28: #{mulnet_v2_forward.1} parent=1 // pred_region
      _
    $region29: #{mulnet_v2_forward.1} parent=1 // pred_fallthru
      _
    // Predicated region
    $region30: #{mulnet_v2_forward.1} parent=1 // pred_check
      _
    $region31: #{mulnet_v2_forward.1} parent=1 // pred_check_branch
      %34 = sbr.rel (0) target = $region33
    $region32: #{mulnet_v2_forward.1} parent=1 // pred_region
      _
    $region33: #{mulnet_v2_forward.1} parent=1 // pred_fallthru
      _
    // Predicated region
    $region34: #{mulnet_v2_forward.1} parent=1 // pred_check
      _
    $region35: #{mulnet_v2_forward.1} parent=1 // pred_check_branch
      %36 = sbr.rel (0) target = $region37
    $region36: #{mulnet_v2_forward.1} parent=1 // pred_region
      _
    $region37: #{mulnet_v2_forward.1} parent=1 // pred_fallthru
      _
    // Predicated region
    $region38: #{mulnet_v2_forward.1} parent=1 // pred_check
      _
    $region39: #{mulnet_v2_forward.1} parent=1 // pred_check_branch
      %38 = sbr.rel (0) target = $region41
    $region40: #{mulnet_v2_forward.1} parent=1 // pred_region
      _
    $region41: #{mulnet_v2_forward.1} parent=1 // pred_fallthru
      _
    %v40 = vld [vmem:[%s0] sm:$0xff]
    %v41 = vld [vmem:[%s0 + $0x8] sm:$0xff]
    %v42 = vpack.c.bf16 %v40, %v40
    %v43 = vpack.c.bf16 %v41, %v41
    %v44 = vpack.c.bf16 %v41, %v40
    %v45 = vld [vmem:[%s2] sm:$0xf]
    %v46 = vld [vmem:[%s3] sm:$0xff]
    %v47 = vld [vmem:[%s3 + $0x8] sm:$0xff]
    %vm48 = vcmask 130048
    %v50 = vsel %vm48, %v45, 0
    %52 = vmatprep.subr.mxu0 0.0
    %53 = vmatpush1.msra.mxu0 0.0
    %54 = vmatprep.subr.mxu0 0.0
    %55 = vmatpush1.msra.mxu0 0.0
    %56 = vmatprep.subr.mxu0 0.0
    %57 = vmatpush1.msra.mxu0 0.0
    %58 = vmatprep.subr.mxu0 0.0
    %59 = vmatpush1.msra.mxu0 0.0
    %60 = vmatprep.subr.mxu0 0.0
    %61 = vmatpush1.msra.mxu0 0.0
    %62 = vmatprep.subr.mxu0 0.0
    %63 = vmatpush1.msra.mxu0 0.0
    %64 = vmatprep.subr.mxu0 0.0
    %65 = vmatpush1.msra.mxu0 0.0
    %66 = vmatprep.subr.mxu0 0.0
    %67 = vmatpush1.msra.mxu0 0.0
    %68 = vmatprep.subr.mxu0 0.0
    %69 = vmatpush1.msra.mxu0 0.0
    %70 = vmatprep.subr.mxu0 0.0
    %71 = vmatpush1.msra.mxu0 0.0
    %72 = vmatprep.subr.mxu0 0.0
    %73 = vmatpush1.msra.mxu0 0.0
    %74 = vmatprep.subr.mxu0 0.0
    %75 = vmatpush1.msra.mxu0 0.0
    %76 = vmatprep.subr.mxu0 0.0
    %77 = vmatpush1.msra.mxu0 0.0
    %78 = vmatprep.subr.mxu0 0.0
    %79 = vmatpush1.msra.mxu0 0.0
    %80 = vmatprep.subr.mxu0 0.0
    %81 = vmatpush1.msra.mxu0 %v47
    %82 = vmatprep.subr.mxu0 0.0
    %83 = vmatpush1.msra.mxu0 %v46
    %84 = vmatprep.subr.mxu0 0.0
    %85 = vmatpush2.msra.mxu0 0.0
    %86 = vmatprep.subr.mxu0 0.0
    %87 = vmatpush2.msra.mxu0 0.0
    %88 = vmatprep.subr.mxu0 0.0
    %89 = vmatpush2.msra.mxu0 0.0
    %90 = vmatprep.subr.mxu0 0.0
    %91 = vmatpush2.msra.mxu0 0.0
    %92 = vmatprep.subr.mxu0 0.0
    %93 = vmatpush2.msra.mxu0 0.0
    %94 = vmatprep.subr.mxu0 0.0
    %95 = vmatpush2.msra.mxu0 0.0
    %96 = vmatprep.subr.mxu0 0.0
    %97 = vmatpush2.msra.mxu0 0.0
    %98 = vmatprep.subr.mxu0 0.0
    %99 = vmatpush2.msra.mxu0 0.0
    %100 = vmatprep.subr.mxu0 0.0
    %101 = vmatpush2.msra.mxu0 0.0
    %102 = vmatprep.subr.mxu0 0.0
    %103 = vmatpush2.msra.mxu0 0.0
    %104 = vmatprep.subr.mxu0 0.0
    %105 = vmatpush2.msra.mxu0 0.0
    %106 = vmatprep.subr.mxu0 0.0
    %107 = vmatpush2.msra.mxu0 0.0
    %108 = vmatprep.subr.mxu0 0.0
    %109 = vmatpush2.msra.mxu0 0.0
    %110 = vmatprep.subr.mxu0 0.0
    %111 = vmatpush2.msra.mxu0 0.0
    %112 = vmatprep.subr.mxu0 0.0
    %113 = vmatpush2.msra.mxu0 0.0
    %114 = vmatprep.subr.mxu0 0.0
    %115 = vmatpush2.msra.mxu0 0.0
    %116 = vmatprep.mubr.f32.mxu0 0.0
    %117 = vmatmul.mubr.f32.gmra.mxu0 %v50
    %v118 = vpop.f32.mrf.mxu0
    %v119 = vadd.f32 0.0, %v118
    %v120 = vpop.f32.mrf.mxu0
    %121 = vdwg.mxu0
    %v122 = vpack.c.bf16 %v119, %v119
    %vm123 = vcmask 261120
    %v125 = vsel %vm123, %v44, 0
    %v128 = vsel %vm123, %v122, 0
    %130 = vmatprep.subr.bf16.mxu0 0
    %131 = vmatpush1.bf16.xpose.msra.mxu0 0
    %132 = vmatprep.subr.bf16.mxu0 0
    %133 = vmatpush1.bf16.xpose.msra.mxu0 0
    %134 = vmatprep.subr.bf16.mxu0 0
    %135 = vmatpush1.bf16.xpose.msra.mxu0 0
    %136 = vmatprep.subr.bf16.mxu0 0
    %137 = vmatpush1.bf16.xpose.msra.mxu0 0
    %138 = vmatprep.subr.bf16.mxu0 0
    %139 = vmatpush1.bf16.xpose.msra.mxu0 0
    %140 = vmatprep.subr.bf16.mxu0 0
    %141 = vmatpush1.bf16.xpose.msra.mxu0 0
    %142 = vmatprep.subr.bf16.mxu0 0
    %143 = vmatpush1.bf16.xpose.msra.mxu0 0
    %144 = vmatprep.subr.bf16.mxu0 0
    %145 = vmatpush1.bf16.xpose.msra.mxu0 %v128
    %146 = vmatprep.subr.bf16.mxu0 0
    %147 = vmatpush2.bf16.xpose.msra.mxu0 0
    %148 = vmatprep.subr.bf16.mxu0 0
    %149 = vmatpush2.bf16.xpose.msra.mxu0 0
    %150 = vmatprep.subr.bf16.mxu0 0
    %151 = vmatpush2.bf16.xpose.msra.mxu0 0
    %152 = vmatprep.subr.bf16.mxu0 0
    %153 = vmatpush2.bf16.xpose.msra.mxu0 0
    %154 = vmatprep.subr.bf16.mxu0 0
    %155 = vmatpush2.bf16.xpose.msra.mxu0 0
    %156 = vmatprep.subr.bf16.mxu0 0
    %157 = vmatpush2.bf16.xpose.msra.mxu0 0
    %158 = vmatprep.subr.bf16.mxu0 0
    %159 = vmatpush2.bf16.xpose.msra.mxu0 0
    %160 = vmatprep.subr.bf16.mxu0 0
    %161 = vmatpush2.bf16.xpose.msra.mxu0 0
    %162 = vmatprep.mubr.bf16.mxu0 0
    %163 = vmatmul.mubr.bf16.gmra.mxu0 %v125
    %v164 = vpop.f32.mrf.mxu0
    %v165 = vadd.f32 0.0, %v164
    %v166 = vpop.f32.mrf.mxu0
    %v167 = vpop.f32.mrf.mxu0
    %v168 = vadd.f32 0.0, %v167
    %v169 = vpop.f32.mrf.mxu0
    %170 = vdwg.mxu0
    %171 = vxpose.xlu0.b32.start [1/16] %v165, 128
    %172 = vxpose.xlu0.b32.cont [2/16] 0.0, 128
    %173 = vxpose.xlu0.b32.cont [3/16] 0.0, 128
    %174 = vxpose.xlu0.b32.cont [4/16] 0.0, 128
    %175 = vxpose.xlu0.b32.cont [5/16] 0.0, 128
    %176 = vxpose.xlu0.b32.cont [6/16] 0.0, 128
    %177 = vxpose.xlu0.b32.cont [7/16] 0.0, 128
    %178 = vxpose.xlu0.b32.cont [8/16] 0.0, 128
    %179 = vxpose.xlu0.b32.cont [9/16] 0.0, 128
    %180 = vxpose.xlu0.b32.cont [10/16] 0.0, 128
    %181 = vxpose.xlu0.b32.cont [11/16] 0.0, 128
    %182 = vxpose.xlu0.b32.cont [12/16] 0.0, 128
    %183 = vxpose.xlu0.b32.cont [13/16] 0.0, 128
    %184 = vxpose.xlu0.b32.cont [14/16] 0.0, 128
    %185 = vxpose.xlu0.b32.cont [15/16] 0.0, 128
    %186 = vxpose.xlu0.b32.end [16/16] 0.0, 128
    %v187 = vpop.trf.xlu0
    %v188 = vpop.trf.xlu0
    %v189 = vpop.trf.xlu0
    %v190 = vpop.trf.xlu0
    %v191 = vpop.trf.xlu0
    %v192 = vpop.trf.xlu0
    %v193 = vpop.trf.xlu0
    %v194 = vpop.trf.xlu0
    %v195 = vpop.trf.xlu0
    %v196 = vpop.trf.xlu0
    %v197 = vpop.trf.xlu0
    %v198 = vpop.trf.xlu0
    %v199 = vpop.trf.xlu0
    %v200 = vpop.trf.xlu0
    %v201 = vpop.trf.xlu0
    %v202 = vpop.trf.xlu0
    %203 = vxpose.xlu0.b32.start [1/16] %v168, 128
    %204 = vxpose.xlu0.b32.cont [2/16] 0.0, 128
    %205 = vxpose.xlu0.b32.cont [3/16] 0.0, 128
    %206 = vxpose.xlu0.b32.cont [4/16] 0.0, 128
    %207 = vxpose.xlu0.b32.cont [5/16] 0.0, 128
    %208 = vxpose.xlu0.b32.cont [6/16] 0.0, 128
    %209 = vxpose.xlu0.b32.cont [7/16] 0.0, 128
    %210 = vxpose.xlu0.b32.cont [8/16] 0.0, 128
    %211 = vxpose.xlu0.b32.cont [9/16] 0.0, 128
    %212 = vxpose.xlu0.b32.cont [10/16] 0.0, 128
    %213 = vxpose.xlu0.b32.cont [11/16] 0.0, 128
    %214 = vxpose.xlu0.b32.cont [12/16] 0.0, 128
    %215 = vxpose.xlu0.b32.cont [13/16] 0.0, 128
    %216 = vxpose.xlu0.b32.cont [14/16] 0.0, 128
    %217 = vxpose.xlu0.b32.cont [15/16] 0.0, 128
    %218 = vxpose.xlu0.b32.end [16/16] 0.0, 128
    %v219 = vpop.trf.xlu0
    %v220 = vpop.trf.xlu0
    %v221 = vpop.trf.xlu0
    %v222 = vpop.trf.xlu0
    %v223 = vpop.trf.xlu0
    %v224 = vpop.trf.xlu0
    %v225 = vpop.trf.xlu0
    %v226 = vpop.trf.xlu0
    %v227 = vpop.trf.xlu0
    %v228 = vpop.trf.xlu0
    %v229 = vpop.trf.xlu0
    %v230 = vpop.trf.xlu0
    %v231 = vpop.trf.xlu0
    %v232 = vpop.trf.xlu0
    %v233 = vpop.trf.xlu0
    %v234 = vpop.trf.xlu0
    %v235 = vld [vmem:[%s1] sm:$0x3]
    %v238 = vunpack.c.l.s4 1966171168
    %v239 = vunpack.c.0.s8 %v238
    %v240 = vlaneseq
    %v241 = vshrl.u32 %v240, 7
    %v242 = vsub.s32 %v239, %v241
    %v243 = vrot.slane %v235, %v242
    %v244 = vcombine.high %v243, %v243
    %v246 = vunpack.c.l.s4 1966171168
    %v247 = vunpack.c.0.s8 %v246
    %v248 = vlaneseq
    %v249 = vshrl.u32 %v248, 7
    %v250 = vsub.s32 %v247, %v249
    %v251 = vrot.slane %v243, %v250
    %v253 = vunpack.c.l.s4 1966171168
    %v254 = vunpack.c.0.s8 %v253
    %v255 = vlaneseq
    %v256 = vshrl.u32 %v255, 7
    %v257 = vsub.s32 %v254, %v256
    %v258 = vrot.slane %v244, %v257
    %v261 = vsub.f32 %v251, 1.0
    %v262 = vsub.f32 %v258, 1.0
    %v263 = vmul.f32 %v261, 1e+09
    %v264 = vmul.f32 %v262, 1e+09
    %v267 = vlaneseq
    %v268 = vshrl.u32 %v267, 7
    %v269 = vsub.s32 0, %v268
    %v270 = vrot.slane %v263, %v269
    %v271 = vlaneseq
    %v272 = vshrl.u32 %v271, 7
    %v273 = vsub.s32 0, %v272
    %v274 = vrot.slane %v264, %v273
    %v277 = vadd.f32 %v187, %v270
    %v278 = vadd.f32 %v219, %v274
    %vm279 = vcmask 60416
    %v280 = vsel %vm279, %v277, -inf
    %281 = vmax.xlane.f32.xlu0 %v280
    %v282 = vpop.xlane.xlu0 %281
    %v283 = vsel %vm279, %v278, -inf
    %284 = vmax.xlane.f32.xlu0 %v283
    %v285 = vpop.xlane.xlu0 %284
    %v286 = vsub.f32 %v277, %v282
    %v287 = vsub.f32 %v278, %v285
    %v288 = vmul.f32 %v286, 1.442695
    %v289 = vpow.pop %v288
    %v290 = vmul.f32 %v287, 1.442695
    %v291 = vpow.pop %v290
    %v292 = vsel %vm279, %v289, 0.0
    %293 = vadd.xlane.f32.xlu0 %v292
    %v294 = vpop.xlane.xlu0 %293
    %v295 = vsel %vm279, %v291, 0.0
    %296 = vadd.xlane.f32.xlu0 %v295
    %v297 = vpop.xlane.xlu0 %296
    %v298 = vrcp.pop %v294
    %v299 = vmul.f32 %v289, %v298
    %v300 = vrcp.pop %v297
    %v301 = vmul.f32 %v291, %v300
    %302 = vst.msk [vmem:[%s12] sm:$0xf] %vm279, %v277
    %303 = vst.msk [vmem:[%s12 + $0x4] sm:$0xf] %vm279, %v278
    %304 = vst.msk [vmem:[%s11] sm:$0xf] %vm279, %v299
    %305 = vst.msk [vmem:[%s11 + $0x4] sm:$0xf] %vm279, %v301
    %v306 = vpack.c.bf16 %v299, %v299
    %v307 = vpack.c.bf16 %v301, %v301
    %vm308 = vcmask 64512
    %v310 = vsel %vm308, %v306, 0
    %vm312 = vcmask 1043456
    %v314 = vsel %vm312, %v42, 0
    %316 = vmatprep.subr.bf16.mxu0 0
    %317 = vmatpush1.bf16.msra.mxu0 0
    %318 = vmatprep.subr.bf16.mxu0 0
    %319 = vmatpush1.bf16.msra.mxu0 0
    %320 = vmatprep.subr.bf16.mxu0 0
    %321 = vmatpush1.bf16.msra.mxu0 0
    %322 = vmatprep.subr.bf16.mxu0 0
    %323 = vmatpush1.bf16.msra.mxu0 0
    %324 = vmatprep.subr.bf16.mxu0 0
    %325 = vmatpush1.bf16.msra.mxu0 0
    %326 = vmatprep.subr.bf16.mxu0 0
    %327 = vmatpush1.bf16.msra.mxu0 0
    %328 = vmatprep.subr.bf16.mxu0 0
    %329 = vmatpush1.bf16.msra.mxu0 0
    %330 = vmatprep.subr.bf16.mxu0 0
    %331 = vmatpush1.bf16.msra.mxu0 %v314
    %332 = vmatprep.subr.bf16.mxu0 0
    %333 = vmatpush2.bf16.msra.mxu0 0
    %334 = vmatprep.subr.bf16.mxu0 0
    %335 = vmatpush2.bf16.msra.mxu0 0
    %336 = vmatprep.subr.bf16.mxu0 0
    %337 = vmatpush2.bf16.msra.mxu0 0
    %338 = vmatprep.subr.bf16.mxu0 0
    %339 = vmatpush2.bf16.msra.mxu0 0
    %340 = vmatprep.subr.bf16.mxu0 0
    %341 = vmatpush2.bf16.msra.mxu0 0
    %342 = vmatprep.subr.bf16.mxu0 0
    %343 = vmatpush2.bf16.msra.mxu0 0
    %344 = vmatprep.subr.bf16.mxu0 0
    %345 = vmatpush2.bf16.msra.mxu0 0
    %346 = vmatprep.subr.bf16.mxu0 0
    %347 = vmatpush2.bf16.msra.mxu0 0
    %348 = vmatprep.mubr.bf16.mxu0 0
    %349 = vmatmul.mubr.bf16.gmra.mxu0 %v310
    %v350 = vpop.f32.mrf.mxu0
    %v351 = vadd.f32 0.0, %v350
    %v352 = vpop.f32.mrf.mxu0
    %v353 = vpop.f32.mrf.mxu0
    %v354 = vpop.f32.mrf.mxu0
    %355 = vdwg.mxu0
    %v357 = vsel %vm308, %v307, 0
    %v360 = vsel %vm312, %v43, 0
    %362 = vmatprep.subr.bf16.mxu0 0
    %363 = vmatpush1.bf16.msra.mxu0 0
    %364 = vmatprep.subr.bf16.mxu0 0
    %365 = vmatpush1.bf16.msra.mxu0 0
    %366 = vmatprep.subr.bf16.mxu0 0
    %367 = vmatpush1.bf16.msra.mxu0 0
    %368 = vmatprep.subr.bf16.mxu0 0
    %369 = vmatpush1.bf16.msra.mxu0 0
    %370 = vmatprep.subr.bf16.mxu0 0
    %371 = vmatpush1.bf16.msra.mxu0 0
    %372 = vmatprep.subr.bf16.mxu0 0
    %373 = vmatpush1.bf16.msra.mxu0 0
    %374 = vmatprep.subr.bf16.mxu0 0
    %375 = vmatpush1.bf16.msra.mxu0 0
    %376 = vmatprep.subr.bf16.mxu0 0
    %377 = vmatpush1.bf16.msra.mxu0 %v360
    %378 = vmatprep.subr.bf16.mxu0 0
    %379 = vmatpush2.bf16.msra.mxu0 0
    %380 = vmatprep.subr.bf16.mxu0 0
    %381 = vmatpush2.bf16.msra.mxu0 0
    %382 = vmatprep.subr.bf16.mxu0 0
    %383 = vmatpush2.bf16.msra.mxu0 0
    %384 = vmatprep.subr.bf16.mxu0 0
    %385 = vmatpush2.bf16.msra.mxu0 0
    %386 = vmatprep.subr.bf16.mxu0 0
    %387 = vmatpush2.bf16.msra.mxu0 0
    %388 = vmatprep.subr.bf16.mxu0 0
    %389 = vmatpush2.bf16.msra.mxu0 0
    %390 = vmatprep.subr.bf16.mxu0 0
    %391 = vmatpush2.bf16.msra.mxu0 0
    %392 = vmatprep.subr.bf16.mxu0 0
    %393 = vmatpush2.bf16.msra.mxu0 0
    %394 = vmatprep.mubr.bf16.mxu0 0
    %395 = vmatmul.mubr.bf16.gmra.mxu0 %v357
    %v396 = vpop.f32.mrf.mxu0
    %v397 = vadd.f32 0.0, %v396
    %v398 = vpop.f32.mrf.mxu0
    %v399 = vpop.f32.mrf.mxu0
    %v400 = vpop.f32.mrf.mxu0
    %401 = vdwg.mxu0
    %v402 = vld [vmem:[%s4] sm:$0xff]
    %v403 = vld [vmem:[%s4 + $0x8] sm:$0xff]
    %v404 = vld [vmem:[%s4 + $0x10] sm:$0xff]
    %v405 = vld [vmem:[%s4 + $0x18] sm:$0xff]
    %v406 = vld [vmem:[%s5] sm:$0x1]
    %v408 = vlaneseq
    %v409 = vshrl.u32 %v408, 7
    %v410 = vsub.s32 0, %v409
    %v411 = vrot.slane %v406, %v410
    %v415 = vrot.slane %v397, 7
    %vm416 = vcmask 1041409
    %v417 = vsel %vm416, %v415, %v351
    %v418 = vsel %vm123, %v417, 0
    %420 = vmatprep.subr.mxu0 0.0
    %421 = vmatpush1.msra.mxu0 0.0
    %422 = vmatprep.subr.mxu0 0.0
    %423 = vmatpush1.msra.mxu0 0.0
    %424 = vmatprep.subr.mxu0 0.0
    %425 = vmatpush1.msra.mxu0 0.0
    %426 = vmatprep.subr.mxu0 0.0
    %427 = vmatpush1.msra.mxu0 0.0
    %428 = vmatprep.subr.mxu0 0.0
    %429 = vmatpush1.msra.mxu0 0.0
    %430 = vmatprep.subr.mxu0 0.0
    %431 = vmatpush1.msra.mxu0 0.0
    %432 = vmatprep.subr.mxu0 0.0
    %433 = vmatpush1.msra.mxu0 0.0
    %434 = vmatprep.subr.mxu0 0.0
    %435 = vmatpush1.msra.mxu0 0.0
    %436 = vmatprep.subr.mxu0 0.0
    %437 = vmatpush1.msra.mxu0 0.0
    %438 = vmatprep.subr.mxu0 0.0
    %439 = vmatpush1.msra.mxu0 0.0
    %440 = vmatprep.subr.mxu0 0.0
    %441 = vmatpush1.msra.mxu0 0.0
    %442 = vmatprep.subr.mxu0 0.0
    %443 = vmatpush1.msra.mxu0 0.0
    %444 = vmatprep.subr.mxu0 0.0
    %445 = vmatpush1.msra.mxu0 %v405
    %446 = vmatprep.subr.mxu0 0.0
    %447 = vmatpush1.msra.mxu0 %v404
    %448 = vmatprep.subr.mxu0 0.0
    %449 = vmatpush1.msra.mxu0 %v403
    %450 = vmatprep.subr.mxu0 0.0
    %451 = vmatpush1.msra.mxu0 %v402
    %452 = vmatprep.subr.mxu0 0.0
    %453 = vmatpush2.msra.mxu0 0.0
    %454 = vmatprep.subr.mxu0 0.0
    %455 = vmatpush2.msra.mxu0 0.0
    %456 = vmatprep.subr.mxu0 0.0
    %457 = vmatpush2.msra.mxu0 0.0
    %458 = vmatprep.subr.mxu0 0.0
    %459 = vmatpush2.msra.mxu0 0.0
    %460 = vmatprep.subr.mxu0 0.0
    %461 = vmatpush2.msra.mxu0 0.0
    %462 = vmatprep.subr.mxu0 0.0
    %463 = vmatpush2.msra.mxu0 0.0
    %464 = vmatprep.subr.mxu0 0.0
    %465 = vmatpush2.msra.mxu0 0.0
    %466 = vmatprep.subr.mxu0 0.0
    %467 = vmatpush2.msra.mxu0 0.0
    %468 = vmatprep.subr.mxu0 0.0
    %469 = vmatpush2.msra.mxu0 0.0
    %470 = vmatprep.subr.mxu0 0.0
    %471 = vmatpush2.msra.mxu0 0.0
    %472 = vmatprep.subr.mxu0 0.0
    %473 = vmatpush2.msra.mxu0 0.0
    %474 = vmatprep.subr.mxu0 0.0
    %475 = vmatpush2.msra.mxu0 0.0
    %476 = vmatprep.subr.mxu0 0.0
    %477 = vmatpush2.msra.mxu0 0.0
    %478 = vmatprep.subr.mxu0 0.0
    %479 = vmatpush2.msra.mxu0 0.0
    %480 = vmatprep.subr.mxu0 0.0
    %481 = vmatpush2.msra.mxu0 0.0
    %482 = vmatprep.subr.mxu0 0.0
    %483 = vmatpush2.msra.mxu0 0.0
    %484 = vmatprep.mubr.f32.mxu0 0.0
    %485 = vmatmul.mubr.f32.gmra.mxu0 %v418
    %v486 = vpop.f32.mrf.mxu0
    %v487 = vadd.f32 %v411, %v486
    %v488 = vpop.f32.mrf.mxu0
    %489 = vdwg.mxu0
    %v490 = vtanh.pop %v487
    %v491 = vld [vmem:[%s6] sm:$0xff]
    %v492 = vld [vmem:[%s6 + $0x8] sm:$0xff]
    %v493 = vld [vmem:[%s6 + $0x10] sm:$0xff]
    %v494 = vld [vmem:[%s6 + $0x18] sm:$0xff]
    %v495 = vrot.slane %v351, 1
    %v496 = vsel %vm416, %v397, %v495
    %v497 = vsel %vm123, %v496, 0
    %499 = vmatprep.subr.mxu0 0.0
    %500 = vmatpush1.msra.mxu0 0.0
    %501 = vmatprep.subr.mxu0 0.0
    %502 = vmatpush1.msra.mxu0 0.0
    %503 = vmatprep.subr.mxu0 0.0
    %504 = vmatpush1.msra.mxu0 0.0
    %505 = vmatprep.subr.mxu0 0.0
    %506 = vmatpush1.msra.mxu0 0.0
    %507 = vmatprep.subr.mxu0 0.0
    %508 = vmatpush1.msra.mxu0 0.0
    %509 = vmatprep.subr.mxu0 0.0
    %510 = vmatpush1.msra.mxu0 0.0
    %511 = vmatprep.subr.mxu0 0.0
    %512 = vmatpush1.msra.mxu0 0.0
    %513 = vmatprep.subr.mxu0 0.0
    %514 = vmatpush1.msra.mxu0 0.0
    %515 = vmatprep.subr.mxu0 0.0
    %516 = vmatpush1.msra.mxu0 0.0
    %517 = vmatprep.subr.mxu0 0.0
    %518 = vmatpush1.msra.mxu0 0.0
    %519 = vmatprep.subr.mxu0 0.0
    %520 = vmatpush1.msra.mxu0 0.0
    %521 = vmatprep.subr.mxu0 0.0
    %522 = vmatpush1.msra.mxu0 0.0
    %523 = vmatprep.subr.mxu0 0.0
    %524 = vmatpush1.msra.mxu0 %v405
    %525 = vmatprep.subr.mxu0 0.0
    %526 = vmatpush1.msra.mxu0 %v404
    %527 = vmatprep.subr.mxu0 0.0
    %528 = vmatpush1.msra.mxu0 %v403
    %529 = vmatprep.subr.mxu0 0.0
    %530 = vmatpush1.msra.mxu0 %v402
    %531 = vmatprep.subr.mxu0 0.0
    %532 = vmatpush2.msra.mxu0 0.0
    %533 = vmatprep.subr.mxu0 0.0
    %534 = vmatpush2.msra.mxu0 0.0
    %535 = vmatprep.subr.mxu0 0.0
    %536 = vmatpush2.msra.mxu0 0.0
    %537 = vmatprep.subr.mxu0 0.0
    %538 = vmatpush2.msra.mxu0 0.0
    %539 = vmatprep.subr.mxu0 0.0
    %540 = vmatpush2.msra.mxu0 0.0
    %541 = vmatprep.subr.mxu0 0.0
    %542 = vmatpush2.msra.mxu0 0.0
    %543 = vmatprep.subr.mxu0 0.0
    %544 = vmatpush2.msra.mxu0 0.0
    %545 = vmatprep.subr.mxu0 0.0
    %546 = vmatpush2.msra.mxu0 0.0
    %547 = vmatprep.subr.mxu0 0.0
    %548 = vmatpush2.msra.mxu0 0.0
    %549 = vmatprep.subr.mxu0 0.0
    %550 = vmatpush2.msra.mxu0 0.0
    %551 = vmatprep.subr.mxu0 0.0
    %552 = vmatpush2.msra.mxu0 0.0
    %553 = vmatprep.subr.mxu0 0.0
    %554 = vmatpush2.msra.mxu0 0.0
    %555 = vmatprep.subr.mxu0 0.0
    %556 = vmatpush2.msra.mxu0 0.0
    %557 = vmatprep.subr.mxu0 0.0
    %558 = vmatpush2.msra.mxu0 0.0
    %559 = vmatprep.subr.mxu0 0.0
    %560 = vmatpush2.msra.mxu0 0.0
    %561 = vmatprep.subr.mxu0 0.0
    %562 = vmatpush2.msra.mxu0 0.0
    %563 = vmatprep.mubr.f32.mxu0 0.0
    %564 = vmatmul.mubr.f32.gmra.mxu0 %v497
    %v565 = vpop.f32.mrf.mxu0
    %v566 = vadd.f32 %v411, %v565
    %v567 = vpop.f32.mrf.mxu0
    %568 = vdwg.mxu0
    %v569 = vtanh.pop %v566
    %s570 = scalar_lea.vmem %s6, 32
    %v571 = vld [vmem:[%s570] sm:$0xff]
    %v572 = vld [vmem:[%s570 + $0x8] sm:$0xff]
    %v573 = vld [vmem:[%s570 + $0x10] sm:$0xff]
    %v574 = vld [vmem:[%s570 + $0x18] sm:$0xff]
    %v576 = vsel %vm123, %v569, 0
    %578 = vmatprep.subr.mxu0 0.0
    %579 = vmatpush1.msra.mxu0 0.0
    %580 = vmatprep.subr.mxu0 0.0
    %581 = vmatpush1.msra.mxu0 0.0
    %582 = vmatprep.subr.mxu0 0.0
    %583 = vmatpush1.msra.mxu0 0.0
    %584 = vmatprep.subr.mxu0 0.0
    %585 = vmatpush1.msra.mxu0 0.0
    %586 = vmatprep.subr.mxu0 0.0
    %587 = vmatpush1.msra.mxu0 0.0
    %588 = vmatprep.subr.mxu0 0.0
    %589 = vmatpush1.msra.mxu0 0.0
    %590 = vmatprep.subr.mxu0 0.0
    %591 = vmatpush1.msra.mxu0 0.0
    %592 = vmatprep.subr.mxu0 0.0
    %593 = vmatpush1.msra.mxu0 0.0
    %594 = vmatprep.subr.mxu0 0.0
    %595 = vmatpush1.msra.mxu0 0.0
    %596 = vmatprep.subr.mxu0 0.0
    %597 = vmatpush1.msra.mxu0 0.0
    %598 = vmatprep.subr.mxu0 0.0
    %599 = vmatpush1.msra.mxu0 0.0
    %600 = vmatprep.subr.mxu0 0.0
    %601 = vmatpush1.msra.mxu0 0.0
    %602 = vmatprep.subr.mxu0 0.0
    %603 = vmatpush1.msra.mxu0 %v574
    %604 = vmatprep.subr.mxu0 0.0
    %605 = vmatpush1.msra.mxu0 %v573
    %606 = vmatprep.subr.mxu0 0.0
    %607 = vmatpush1.msra.mxu0 %v572
    %608 = vmatprep.subr.mxu0 0.0
    %609 = vmatpush1.msra.mxu0 %v571
    %610 = vmatprep.subr.mxu0 0.0
    %611 = vmatpush2.msra.mxu0 0.0
    %612 = vmatprep.subr.mxu0 0.0
    %613 = vmatpush2.msra.mxu0 0.0
    %614 = vmatprep.subr.mxu0 0.0
    %615 = vmatpush2.msra.mxu0 0.0
    %616 = vmatprep.subr.mxu0 0.0
    %617 = vmatpush2.msra.mxu0 0.0
    %618 = vmatprep.subr.mxu0 0.0
    %619 = vmatpush2.msra.mxu0 0.0
    %620 = vmatprep.subr.mxu0 0.0
    %621 = vmatpush2.msra.mxu0 0.0
    %622 = vmatprep.subr.mxu0 0.0
    %623 = vmatpush2.msra.mxu0 0.0
    %624 = vmatprep.subr.mxu0 0.0
    %625 = vmatpush2.msra.mxu0 0.0
    %626 = vmatprep.subr.mxu0 0.0
    %627 = vmatpush2.msra.mxu0 0.0
    %628 = vmatprep.subr.mxu0 0.0
    %629 = vmatpush2.msra.mxu0 0.0
    %630 = vmatprep.subr.mxu0 0.0
    %631 = vmatpush2.msra.mxu0 0.0
    %632 = vmatprep.subr.mxu0 0.0
    %633 = vmatpush2.msra.mxu0 0.0
    %634 = vmatprep.subr.mxu0 0.0
    %635 = vmatpush2.msra.mxu0 0.0
    %636 = vmatprep.subr.mxu0 0.0
    %637 = vmatpush2.msra.mxu0 0.0
    %638 = vmatprep.subr.mxu0 0.0
    %639 = vmatpush2.msra.mxu0 0.0
    %640 = vmatprep.subr.mxu0 0.0
    %641 = vmatpush2.msra.mxu0 0.0
    %642 = vmatprep.mubr.f32.mxu0 0.0
    %643 = vmatmul.mubr.f32.gmra.mxu0 %v576
    %v644 = vpop.f32.mrf.mxu0
    %v645 = vadd.f32 0.0, %v644
    %v646 = vpop.f32.mrf.mxu0
    %647 = vdwg.mxu0
    %v649 = vsel %vm123, %v490, 0
    %651 = vmatprep.subr.mxu0 0.0
    %652 = vmatpush1.msra.mxu0 0.0
    %653 = vmatprep.subr.mxu0 0.0
    %654 = vmatpush1.msra.mxu0 0.0
    %655 = vmatprep.subr.mxu0 0.0
    %656 = vmatpush1.msra.mxu0 0.0
    %657 = vmatprep.subr.mxu0 0.0
    %658 = vmatpush1.msra.mxu0 0.0
    %659 = vmatprep.subr.mxu0 0.0
    %660 = vmatpush1.msra.mxu0 0.0
    %661 = vmatprep.subr.mxu0 0.0
    %662 = vmatpush1.msra.mxu0 0.0
    %663 = vmatprep.subr.mxu0 0.0
    %664 = vmatpush1.msra.mxu0 0.0
    %665 = vmatprep.subr.mxu0 0.0
    %666 = vmatpush1.msra.mxu0 0.0
    %667 = vmatprep.subr.mxu0 0.0
    %668 = vmatpush1.msra.mxu0 0.0
    %669 = vmatprep.subr.mxu0 0.0
    %670 = vmatpush1.msra.mxu0 0.0
    %671 = vmatprep.subr.mxu0 0.0
    %672 = vmatpush1.msra.mxu0 0.0
    %673 = vmatprep.subr.mxu0 0.0
    %674 = vmatpush1.msra.mxu0 0.0
    %675 = vmatprep.subr.mxu0 0.0
    %676 = vmatpush1.msra.mxu0 %v494
    %677 = vmatprep.subr.mxu0 0.0
    %678 = vmatpush1.msra.mxu0 %v493
    %679 = vmatprep.subr.mxu0 0.0
    %680 = vmatpush1.msra.mxu0 %v492
    %681 = vmatprep.subr.mxu0 0.0
    %682 = vmatpush1.msra.mxu0 %v491
    %683 = vmatprep.subr.mxu0 0.0
    %684 = vmatpush2.msra.mxu0 0.0
    %685 = vmatprep.subr.mxu0 0.0
    %686 = vmatpush2.msra.mxu0 0.0
    %687 = vmatprep.subr.mxu0 0.0
    %688 = vmatpush2.msra.mxu0 0.0
    %689 = vmatprep.subr.mxu0 0.0
    %690 = vmatpush2.msra.mxu0 0.0
    %691 = vmatprep.subr.mxu0 0.0
    %692 = vmatpush2.msra.mxu0 0.0
    %693 = vmatprep.subr.mxu0 0.0
    %694 = vmatpush2.msra.mxu0 0.0
    %695 = vmatprep.subr.mxu0 0.0
    %696 = vmatpush2.msra.mxu0 0.0
    %697 = vmatprep.subr.mxu0 0.0
    %698 = vmatpush2.msra.mxu0 0.0
    %699 = vmatprep.subr.mxu0 0.0
    %700 = vmatpush2.msra.mxu0 0.0
    %701 = vmatprep.subr.mxu0 0.0
    %702 = vmatpush2.msra.mxu0 0.0
    %703 = vmatprep.subr.mxu0 0.0
    %704 = vmatpush2.msra.mxu0 0.0
    %705 = vmatprep.subr.mxu0 0.0
    %706 = vmatpush2.msra.mxu0 0.0
    %707 = vmatprep.subr.mxu0 0.0
    %708 = vmatpush2.msra.mxu0 0.0
    %709 = vmatprep.subr.mxu0 0.0
    %710 = vmatpush2.msra.mxu0 0.0
    %711 = vmatprep.subr.mxu0 0.0
    %712 = vmatpush2.msra.mxu0 0.0
    %713 = vmatprep.subr.mxu0 0.0
    %714 = vmatpush2.msra.mxu0 0.0
    %715 = vmatprep.mubr.f32.mxu0 0.0
    %716 = vmatmul.mubr.f32.gmra.mxu0 %v649
    %v717 = vpop.f32.mrf.mxu0
    %v718 = vadd.f32 %v645, %v717
    %v719 = vpop.f32.mrf.mxu0
    %720 = vdwg.mxu0
    %v721 = vrot.slane %v351, 2
    %v722 = vrot.slane %v397, 1
    %v723 = vsel %vm416, %v722, %v721
    %v724 = vsel %vm123, %v723, 0
    %726 = vmatprep.subr.mxu0 0.0
    %727 = vmatpush1.msra.mxu0 0.0
    %728 = vmatprep.subr.mxu0 0.0
    %729 = vmatpush1.msra.mxu0 0.0
    %730 = vmatprep.subr.mxu0 0.0
    %731 = vmatpush1.msra.mxu0 0.0
    %732 = vmatprep.subr.mxu0 0.0
    %733 = vmatpush1.msra.mxu0 0.0
    %734 = vmatprep.subr.mxu0 0.0
    %735 = vmatpush1.msra.mxu0 0.0
    %736 = vmatprep.subr.mxu0 0.0
    %737 = vmatpush1.msra.mxu0 0.0
    %738 = vmatprep.subr.mxu0 0.0
    %739 = vmatpush1.msra.mxu0 0.0
    %740 = vmatprep.subr.mxu0 0.0
    %741 = vmatpush1.msra.mxu0 0.0
    %742 = vmatprep.subr.mxu0 0.0
    %743 = vmatpush1.msra.mxu0 0.0
    %744 = vmatprep.subr.mxu0 0.0
    %745 = vmatpush1.msra.mxu0 0.0
    %746 = vmatprep.subr.mxu0 0.0
    %747 = vmatpush1.msra.mxu0 0.0
    %748 = vmatprep.subr.mxu0 0.0
    %749 = vmatpush1.msra.mxu0 0.0
    %750 = vmatprep.subr.mxu0 0.0
    %751 = vmatpush1.msra.mxu0 %v405
    %752 = vmatprep.subr.mxu0 0.0
    %753 = vmatpush1.msra.mxu0 %v404
    %754 = vmatprep.subr.mxu0 0.0
    %755 = vmatpush1.msra.mxu0 %v403
    %756 = vmatprep.subr.mxu0 0.0
    %757 = vmatpush1.msra.mxu0 %v402
    %758 = vmatprep.subr.mxu0 0.0
    %759 = vmatpush2.msra.mxu0 0.0
    %760 = vmatprep.subr.mxu0 0.0
    %761 = vmatpush2.msra.mxu0 0.0
    %762 = vmatprep.subr.mxu0 0.0
    %763 = vmatpush2.msra.mxu0 0.0
    %764 = vmatprep.subr.mxu0 0.0
    %765 = vmatpush2.msra.mxu0 0.0
    %766 = vmatprep.subr.mxu0 0.0
    %767 = vmatpush2.msra.mxu0 0.0
    %768 = vmatprep.subr.mxu0 0.0
    %769 = vmatpush2.msra.mxu0 0.0
    %770 = vmatprep.subr.mxu0 0.0
    %771 = vmatpush2.msra.mxu0 0.0
    %772 = vmatprep.subr.mxu0 0.0
    %773 = vmatpush2.msra.mxu0 0.0
    %774 = vmatprep.subr.mxu0 0.0
    %775 = vmatpush2.msra.mxu0 0.0
    %776 = vmatprep.subr.mxu0 0.0
    %777 = vmatpush2.msra.mxu0 0.0
    %778 = vmatprep.subr.mxu0 0.0
    %779 = vmatpush2.msra.mxu0 0.0
    %780 = vmatprep.subr.mxu0 0.0
    %781 = vmatpush2.msra.mxu0 0.0
    %782 = vmatprep.subr.mxu0 0.0
    %783 = vmatpush2.msra.mxu0 0.0
    %784 = vmatprep.subr.mxu0 0.0
    %785 = vmatpush2.msra.mxu0 0.0
    %786 = vmatprep.subr.mxu0 0.0
    %787 = vmatpush2.msra.mxu0 0.0
    %788 = vmatprep.subr.mxu0 0.0
    %789 = vmatpush2.msra.mxu0 0.0
    %790 = vmatprep.mubr.f32.mxu0 0.0
    %791 = vmatmul.mubr.f32.gmra.mxu0 %v724
    %v792 = vpop.f32.mrf.mxu0
    %v793 = vadd.f32 %v411, %v792
    %v794 = vpop.f32.mrf.mxu0
    %795 = vdwg.mxu0
    %v796 = vtanh.pop %v793
    %s797 = scalar_lea.vmem %s6, 64
    %v798 = vld [vmem:[%s797] sm:$0xff]
    %v799 = vld [vmem:[%s797 + $0x8] sm:$0xff]
    %v800 = vld [vmem:[%s797 + $0x10] sm:$0xff]
    %v801 = vld [vmem:[%s797 + $0x18] sm:$0xff]
    %v803 = vsel %vm123, %v796, 0
    %805 = vmatprep.subr.mxu0 0.0
    %806 = vmatpush1.msra.mxu0 0.0
    %807 = vmatprep.subr.mxu0 0.0
    %808 = vmatpush1.msra.mxu0 0.0
    %809 = vmatprep.subr.mxu0 0.0
    %810 = vmatpush1.msra.mxu0 0.0
    %811 = vmatprep.subr.mxu0 0.0
    %812 = vmatpush1.msra.mxu0 0.0
    %813 = vmatprep.subr.mxu0 0.0
    %814 = vmatpush1.msra.mxu0 0.0
    %815 = vmatprep.subr.mxu0 0.0
    %816 = vmatpush1.msra.mxu0 0.0
    %817 = vmatprep.subr.mxu0 0.0
    %818 = vmatpush1.msra.mxu0 0.0
    %819 = vmatprep.subr.mxu0 0.0
    %820 = vmatpush1.msra.mxu0 0.0
    %821 = vmatprep.subr.mxu0 0.0
    %822 = vmatpush1.msra.mxu0 0.0
    %823 = vmatprep.subr.mxu0 0.0
    %824 = vmatpush1.msra.mxu0 0.0
    %825 = vmatprep.subr.mxu0 0.0
    %826 = vmatpush1.msra.mxu0 0.0
    %827 = vmatprep.subr.mxu0 0.0
    %828 = vmatpush1.msra.mxu0 0.0
    %829 = vmatprep.subr.mxu0 0.0
    %830 = vmatpush1.msra.mxu0 %v801
    %831 = vmatprep.subr.mxu0 0.0
    %832 = vmatpush1.msra.mxu0 %v800
    %833 = vmatprep.subr.mxu0 0.0
    %834 = vmatpush1.msra.mxu0 %v799
    %835 = vmatprep.subr.mxu0 0.0
    %836 = vmatpush1.msra.mxu0 %v798
    %837 = vmatprep.subr.mxu0 0.0
    %838 = vmatpush2.msra.mxu0 0.0
    %839 = vmatprep.subr.mxu0 0.0
    %840 = vmatpush2.msra.mxu0 0.0
    %841 = vmatprep.subr.mxu0 0.0
    %842 = vmatpush2.msra.mxu0 0.0
    %843 = vmatprep.subr.mxu0 0.0
    %844 = vmatpush2.msra.mxu0 0.0
    %845 = vmatprep.subr.mxu0 0.0
    %846 = vmatpush2.msra.mxu0 0.0
    %847 = vmatprep.subr.mxu0 0.0
    %848 = vmatpush2.msra.mxu0 0.0
    %849 = vmatprep.subr.mxu0 0.0
    %850 = vmatpush2.msra.mxu0 0.0
    %851 = vmatprep.subr.mxu0 0.0
    %852 = vmatpush2.msra.mxu0 0.0
    %853 = vmatprep.subr.mxu0 0.0
    %854 = vmatpush2.msra.mxu0 0.0
    %855 = vmatprep.subr.mxu0 0.0
    %856 = vmatpush2.msra.mxu0 0.0
    %857 = vmatprep.subr.mxu0 0.0
    %858 = vmatpush2.msra.mxu0 0.0
    %859 = vmatprep.subr.mxu0 0.0
    %860 = vmatpush2.msra.mxu0 0.0
    %861 = vmatprep.subr.mxu0 0.0
    %862 = vmatpush2.msra.mxu0 0.0
    %863 = vmatprep.subr.mxu0 0.0
    %864 = vmatpush2.msra.mxu0 0.0
    %865 = vmatprep.subr.mxu0 0.0
    %866 = vmatpush2.msra.mxu0 0.0
    %867 = vmatprep.subr.mxu0 0.0
    %868 = vmatpush2.msra.mxu0 0.0
    %869 = vmatprep.mubr.f32.mxu0 0.0
    %870 = vmatmul.mubr.f32.gmra.mxu0 %v803
    %v871 = vpop.f32.mrf.mxu0
    %v872 = vadd.f32 0.0, %v871
    %v873 = vpop.f32.mrf.mxu0
    %874 = vdwg.mxu0
    %v875 = vadd.f32 %v718, %v872
    %v876 = vrot.slane %v351, 3
    %v877 = vrot.slane %v397, 2
    %v878 = vsel %vm416, %v877, %v876
    %v879 = vsel %vm123, %v878, 0
    %881 = vmatprep.subr.mxu0 0.0
    %882 = vmatpush1.msra.mxu0 0.0
    %883 = vmatprep.subr.mxu0 0.0
    %884 = vmatpush1.msra.mxu0 0.0
    %885 = vmatprep.subr.mxu0 0.0
    %886 = vmatpush1.msra.mxu0 0.0
    %887 = vmatprep.subr.mxu0 0.0
    %888 = vmatpush1.msra.mxu0 0.0
    %889 = vmatprep.subr.mxu0 0.0
    %890 = vmatpush1.msra.mxu0 0.0
    %891 = vmatprep.subr.mxu0 0.0
    %892 = vmatpush1.msra.mxu0 0.0
    %893 = vmatprep.subr.mxu0 0.0
    %894 = vmatpush1.msra.mxu0 0.0
    %895 = vmatprep.subr.mxu0 0.0
    %896 = vmatpush1.msra.mxu0 0.0
    %897 = vmatprep.subr.mxu0 0.0
    %898 = vmatpush1.msra.mxu0 0.0
    %899 = vmatprep.subr.mxu0 0.0
    %900 = vmatpush1.msra.mxu0 0.0
    %901 = vmatprep.subr.mxu0 0.0
    %902 = vmatpush1.msra.mxu0 0.0
    %903 = vmatprep.subr.mxu0 0.0
    %904 = vmatpush1.msra.mxu0 0.0
    %905 = vmatprep.subr.mxu0 0.0
    %906 = vmatpush1.msra.mxu0 %v405
    %907 = vmatprep.subr.mxu0 0.0
    %908 = vmatpush1.msra.mxu0 %v404
    %909 = vmatprep.subr.mxu0 0.0
    %910 = vmatpush1.msra.mxu0 %v403
    %911 = vmatprep.subr.mxu0 0.0
    %912 = vmatpush1.msra.mxu0 %v402
    %913 = vmatprep.subr.mxu0 0.0
    %914 = vmatpush2.msra.mxu0 0.0
    %915 = vmatprep.subr.mxu0 0.0
    %916 = vmatpush2.msra.mxu0 0.0
    %917 = vmatprep.subr.mxu0 0.0
    %918 = vmatpush2.msra.mxu0 0.0
    %919 = vmatprep.subr.mxu0 0.0
    %920 = vmatpush2.msra.mxu0 0.0
    %921 = vmatprep.subr.mxu0 0.0
    %922 = vmatpush2.msra.mxu0 0.0
    %923 = vmatprep.subr.mxu0 0.0
    %924 = vmatpush2.msra.mxu0 0.0
    %925 = vmatprep.subr.mxu0 0.0
    %926 = vmatpush2.msra.mxu0 0.0
    %927 = vmatprep.subr.mxu0 0.0
    %928 = vmatpush2.msra.mxu0 0.0
    %929 = vmatprep.subr.mxu0 0.0
    %930 = vmatpush2.msra.mxu0 0.0
    %931 = vmatprep.subr.mxu0 0.0
    %932 = vmatpush2.msra.mxu0 0.0
    %933 = vmatprep.subr.mxu0 0.0
    %934 = vmatpush2.msra.mxu0 0.0
    %935 = vmatprep.subr.mxu0 0.0
    %936 = vmatpush2.msra.mxu0 0.0
    %937 = vmatprep.subr.mxu0 0.0
    %938 = vmatpush2.msra.mxu0 0.0
    %939 = vmatprep.subr.mxu0 0.0
    %940 = vmatpush2.msra.mxu0 0.0
    %941 = vmatprep.subr.mxu0 0.0
    %942 = vmatpush2.msra.mxu0 0.0
    %943 = vmatprep.subr.mxu0 0.0
    %944 = vmatpush2.msra.mxu0 0.0
    %945 = vmatprep.mubr.f32.mxu0 0.0
    %946 = vmatmul.mubr.f32.gmra.mxu0 %v879
    %v947 = vpop.f32.mrf.mxu0
    %v948 = vadd.f32 %v411, %v947
    %v949 = vpop.f32.mrf.mxu0
    %950 = vdwg.mxu0
    %v951 = vtanh.pop %v948
    %s952 = scalar_lea.vmem %s6, 96
    %v953 = vld [vmem:[%s952] sm:$0xff]
    %v954 = vld [vmem:[%s952 + $0x8] sm:$0xff]
    %v955 = vld [vmem:[%s952 + $0x10] sm:$0xff]
    %v956 = vld [vmem:[%s952 + $0x18] sm:$0xff]
    %v958 = vsel %vm123, %v951, 0
    %960 = vmatprep.subr.mxu0 0.0
    %961 = vmatpush1.msra.mxu0 0.0
    %962 = vmatprep.subr.mxu0 0.0
    %963 = vmatpush1.msra.mxu0 0.0
    %964 = vmatprep.subr.mxu0 0.0
    %965 = vmatpush1.msra.mxu0 0.0
    %966 = vmatprep.subr.mxu0 0.0
    %967 = vmatpush1.msra.mxu0 0.0
    %968 = vmatprep.subr.mxu0 0.0
    %969 = vmatpush1.msra.mxu0 0.0
    %970 = vmatprep.subr.mxu0 0.0
    %971 = vmatpush1.msra.mxu0 0.0
    %972 = vmatprep.subr.mxu0 0.0
    %973 = vmatpush1.msra.mxu0 0.0
    %974 = vmatprep.subr.mxu0 0.0
    %975 = vmatpush1.msra.mxu0 0.0
    %976 = vmatprep.subr.mxu0 0.0
    %977 = vmatpush1.msra.mxu0 0.0
    %978 = vmatprep.subr.mxu0 0.0
    %979 = vmatpush1.msra.mxu0 0.0
    %980 = vmatprep.subr.mxu0 0.0
    %981 = vmatpush1.msra.mxu0 0.0
    %982 = vmatprep.subr.mxu0 0.0
    %983 = vmatpush1.msra.mxu0 0.0
    %984 = vmatprep.subr.mxu0 0.0
    %985 = vmatpush1.msra.mxu0 %v956
    %986 = vmatprep.subr.mxu0 0.0
    %987 = vmatpush1.msra.mxu0 %v955
    %988 = vmatprep.subr.mxu0 0.0
    %989 = vmatpush1.msra.mxu0 %v954
    %990 = vmatprep.subr.mxu0 0.0
    %991 = vmatpush1.msra.mxu0 %v953
    %992 = vmatprep.subr.mxu0 0.0
    %993 = vmatpush2.msra.mxu0 0.0
    %994 = vmatprep.subr.mxu0 0.0
    %995 = vmatpush2.msra.mxu0 0.0
    %996 = vmatprep.subr.mxu0 0.0
    %997 = vmatpush2.msra.mxu0 0.0
    %998 = vmatprep.subr.mxu0 0.0
    %999 = vmatpush2.msra.mxu0 0.0
    %1000 = vmatprep.subr.mxu0 0.0
    %1001 = vmatpush2.msra.mxu0 0.0
    %1002 = vmatprep.subr.mxu0 0.0
    %1003 = vmatpush2.msra.mxu0 0.0
    %1004 = vmatprep.subr.mxu0 0.0
    %1005 = vmatpush2.msra.mxu0 0.0
    %1006 = vmatprep.subr.mxu0 0.0
    %1007 = vmatpush2.msra.mxu0 0.0
    %1008 = vmatprep.subr.mxu0 0.0
    %1009 = vmatpush2.msra.mxu0 0.0
    %1010 = vmatprep.subr.mxu0 0.0
    %1011 = vmatpush2.msra.mxu0 0.0
    %1012 = vmatprep.subr.mxu0 0.0
    %1013 = vmatpush2.msra.mxu0 0.0
    %1014 = vmatprep.subr.mxu0 0.0
    %1015 = vmatpush2.msra.mxu0 0.0
    %1016 = vmatprep.subr.mxu0 0.0
    %1017 = vmatpush2.msra.mxu0 0.0
    %1018 = vmatprep.subr.mxu0 0.0
    %1019 = vmatpush2.msra.mxu0 0.0
    %1020 = vmatprep.subr.mxu0 0.0
    %1021 = vmatpush2.msra.mxu0 0.0
    %1022 = vmatprep.subr.mxu0 0.0
    %1023 = vmatpush2.msra.mxu0 0.0
    %1024 = vmatprep.mubr.f32.mxu0 0.0
    %1025 = vmatmul.mubr.f32.gmra.mxu0 %v958
    %v1026 = vpop.f32.mrf.mxu0
    %v1027 = vadd.f32 0.0, %v1026
    %v1028 = vpop.f32.mrf.mxu0
    %1029 = vdwg.mxu0
    %v1030 = vadd.f32 %v875, %v1027
    %v1031 = vld [vmem:[%s7] sm:$0x1]
    %v1033 = vlaneseq
    %v1034 = vshrl.u32 %v1033, 7
    %v1035 = vsub.s32 0, %v1034
    %v1036 = vrot.slane %v1031, %v1035
    %v1038 = vadd.f32 %v1030, %v1036
    %v1039 = vtanh.pop %v1038
    %v1040 = vld [vmem:[%s8] sm:$0xff]
    %v1041 = vld [vmem:[%s8 + $0x8] sm:$0xff]
    %v1042 = vld [vmem:[%s8 + $0x10] sm:$0xff]
    %v1043 = vld [vmem:[%s8 + $0x18] sm:$0xff]
    %v1044 = vld [vmem:[%s9] sm:$0x1]
    %v1046 = vlaneseq
    %v1047 = vshrl.u32 %v1046, 7
    %v1048 = vsub.s32 0, %v1047
    %v1049 = vrot.slane %v1044, %v1048
    %v1052 = vsel %vm123, %v1039, 0
    %1054 = vmatprep.subr.mxu0 0.0
    %1055 = vmatpush1.msra.mxu0 0.0
    %1056 = vmatprep.subr.mxu0 0.0
    %1057 = vmatpush1.msra.mxu0 0.0
    %1058 = vmatprep.subr.mxu0 0.0
    %1059 = vmatpush1.msra.mxu0 0.0
    %1060 = vmatprep.subr.mxu0 0.0
    %1061 = vmatpush1.msra.mxu0 0.0
    %1062 = vmatprep.subr.mxu0 0.0
    %1063 = vmatpush1.msra.mxu0 0.0
    %1064 = vmatprep.subr.mxu0 0.0
    %1065 = vmatpush1.msra.mxu0 0.0
    %1066 = vmatprep.subr.mxu0 0.0
    %1067 = vmatpush1.msra.mxu0 0.0
    %1068 = vmatprep.subr.mxu0 0.0
    %1069 = vmatpush1.msra.mxu0 0.0
    %1070 = vmatprep.subr.mxu0 0.0
    %1071 = vmatpush1.msra.mxu0 0.0
    %1072 = vmatprep.subr.mxu0 0.0
    %1073 = vmatpush1.msra.mxu0 0.0
    %1074 = vmatprep.subr.mxu0 0.0
    %1075 = vmatpush1.msra.mxu0 0.0
    %1076 = vmatprep.subr.mxu0 0.0
    %1077 = vmatpush1.msra.mxu0 0.0
    %1078 = vmatprep.subr.mxu0 0.0
    %1079 = vmatpush1.msra.mxu0 %v1043
    %1080 = vmatprep.subr.mxu0 0.0
    %1081 = vmatpush1.msra.mxu0 %v1042
    %1082 = vmatprep.subr.mxu0 0.0
    %1083 = vmatpush1.msra.mxu0 %v1041
    %1084 = vmatprep.subr.mxu0 0.0
    %1085 = vmatpush1.msra.mxu0 %v1040
    %1086 = vmatprep.subr.mxu0 0.0
    %1087 = vmatpush2.msra.mxu0 0.0
    %1088 = vmatprep.subr.mxu0 0.0
    %1089 = vmatpush2.msra.mxu0 0.0
    %1090 = vmatprep.subr.mxu0 0.0
    %1091 = vmatpush2.msra.mxu0 0.0
    %1092 = vmatprep.subr.mxu0 0.0
    %1093 = vmatpush2.msra.mxu0 0.0
    %1094 = vmatprep.subr.mxu0 0.0
    %1095 = vmatpush2.msra.mxu0 0.0
    %1096 = vmatprep.subr.mxu0 0.0
    %1097 = vmatpush2.msra.mxu0 0.0
    %1098 = vmatprep.subr.mxu0 0.0
    %1099 = vmatpush2.msra.mxu0 0.0
    %1100 = vmatprep.subr.mxu0 0.0
    %1101 = vmatpush2.msra.mxu0 0.0
    %1102 = vmatprep.subr.mxu0 0.0
    %1103 = vmatpush2.msra.mxu0 0.0
    %1104 = vmatprep.subr.mxu0 0.0
    %1105 = vmatpush2.msra.mxu0 0.0
    %1106 = vmatprep.subr.mxu0 0.0
    %1107 = vmatpush2.msra.mxu0 0.0
    %1108 = vmatprep.subr.mxu0 0.0
    %1109 = vmatpush2.msra.mxu0 0.0
    %1110 = vmatprep.subr.mxu0 0.0
    %1111 = vmatpush2.msra.mxu0 0.0
    %1112 = vmatprep.subr.mxu0 0.0
    %1113 = vmatpush2.msra.mxu0 0.0
    %1114 = vmatprep.subr.mxu0 0.0
    %1115 = vmatpush2.msra.mxu0 0.0
    %1116 = vmatprep.subr.mxu0 0.0
    %1117 = vmatpush2.msra.mxu0 0.0
    %1118 = vmatprep.mubr.f32.mxu0 0.0
    %1119 = vmatmul.mubr.f32.gmra.mxu0 %v1052
    %v1120 = vpop.f32.mrf.mxu0
    %v1121 = vadd.f32 %v1049, %v1120
    %v1122 = vpop.f32.mrf.mxu0
    %1123 = vdwg.mxu0
    %vm1124 = vcmask 17408
    %1125 = vst.msk [vmem:[#allocation2] sm:$0x3] %vm1124, %v1121
    // Predicated region
    $region42: #{mulnet_v2_forward.1} parent=1 // pred_check
      _
    $region43: #{mulnet_v2_forward.1} parent=1 // pred_check_branch
      %1127 = sbr.rel (0) target = $region45
    $region44: #{mulnet_v2_forward.1} parent=1 // pred_region
      %s1129 = ssub.s32 32, 32
      %1130 = vsyncadd [#allocation3], %s1129
      %s1132 = sshll.u32 [#allocation2], 4
      %s1133 = int_to_ptr.vmem [resolvable:$true] %s1132
      %1135 = dma.vmem_to_hbm [thread:$0]  %s1133, 32, %s10, [#allocation3]
    $region45: #{mulnet_v2_forward.1} parent=1 // pred_fallthru
      _
    // Predicated region
    $region46: #{mulnet_v2_forward.1} parent=1 // pred_check
      _
    $region47: #{mulnet_v2_forward.1} parent=1 // pred_check_branch
      %1137 = sbr.rel (0) target = $region49
    $region48: #{mulnet_v2_forward.1} parent=1 // pred_region
      _
    $region49: #{mulnet_v2_forward.1} parent=1 // pred_fallthru
      _
    // Predicated region
    $region50: #{mulnet_v2_forward.1} parent=1 // pred_check
      _
    $region51: #{mulnet_v2_forward.1} parent=1 // pred_check_branch
      %1139 = sbr.rel (0) target = $region53
    $region52: #{mulnet_v2_forward.1} parent=1 // pred_region
      _
    $region53: #{mulnet_v2_forward.1} parent=1 // pred_fallthru
      _
    // Predicated region
    $region54: #{mulnet_v2_forward.1} parent=1 // pred_check
      _
    $region55: #{mulnet_v2_forward.1} parent=1 // pred_check_branch
      %1141 = sbr.rel (0) target = $region57
    $region56: #{mulnet_v2_forward.1} parent=1 // pred_region
      %1142 = dma.done [#allocation3], 32
    $region57: #{mulnet_v2_forward.1} parent=1 // pred_fallthru
      _
    // Predicated region
    $region58: #{mulnet_v2_forward.1} parent=1 // pred_check
      _
    $region59: #{mulnet_v2_forward.1} parent=1 // pred_check_branch
      %1144 = sbr.rel (0) target = $region61
    $region60: #{mulnet_v2_forward.1} parent=1 // pred_region
      _
    $region61: #{mulnet_v2_forward.1} parent=1 // pred_fallthru
      _
    // Predicated region
    $region62: #{mulnet_v2_forward.1} parent=1 // pred_check
      _
    $region63: #{mulnet_v2_forward.1} parent=1 // pred_check_branch
      %1146 = sbr.rel (0) target = $region65
    $region64: #{mulnet_v2_forward.1} parent=1 // pred_region
      _
    $region65: #{mulnet_v2_forward.1} parent=1 // pred_fallthru
      _
    %1147 = vsyncpa [#allocation3], 1

</llo_original>
